<compile_context>
chip_gen: v7x
topology: tpu7x:2x2x1
jax: 0.10.0
libtpu: 0.0.40
codegen_flags: <defaults>
</compile_context>

<pallas_src>
import math
import functools

import jax
import jax.numpy as jnp
from jax.experimental import pallas as pl
from jax.experimental.pallas import tpu as pltpu


def _round_up(x, m):
    return ((x + m - 1) // m) * m


def _pick_block_batch(batch, seq_len, target_rows=2048):
    """Largest divisor of `batch` with bt*L <= target_rows and (bt % 8 == 0 or
    bt == batch).  No forced splitting: on single-TC chips the grid is a serial
    loop, so per-step overhead dominates this kernel at small tiles."""
    target_bt = max(1, target_rows // max(seq_len, 1))
    cands = [d for d in range(1, batch + 1)
             if batch % d == 0 and (d % 8 == 0 or d == batch)]
    fits = [d for d in cands if d <= target_bt]
    return max(fits) if fits else min(cands)


# ---------------------------------------------------------------------------
# Fused kernel: QKV projection + per-head exp-attention + additive pooling
# ---------------------------------------------------------------------------
def text_encoder_kernel(h_ref, mask_ref, wqkv_ref, bqkv_ref,
                        w1_ref, b1_ref, w2_ref, b2_ref, out_ref,
                        *, n_heads, d_k, dk_pad, dv_pad, out_pad, compute_dtype):
    f32 = jnp.float32
    bt, L, D = h_ref.shape
    rows = bt * L
    hdk = n_heads * dk_pad          # width of the (padded) Q / K sections
    hdv = n_heads * dv_pad          # width of the (padded) V section / ctx

    m = mask_ref[...]               # (bt, L) f32 -- single mask stream
    key_mask = m[:, None, :]        # (bt, 1, L): broadcast over queries
    tok_mask = m[:, :, None]        # (bt, L, 1): pooling mask

    # ---- fused Q|K|V projection: one (bt*L, D) x (D, 2*hdk+hdv) MXU pass ----
    h2 = h_ref[...].reshape(rows, D)                                   # bf16
    qkv = jnp.dot(h2, wqkv_ref[...],
                  preferred_element_type=f32) + bqkv_ref[...]          # f32

    scale = 1.0 / math.sqrt(d_k)
    hq = w1_ref.shape[1]
    e_pre = jnp.zeros((rows, hq), dtype=f32)     # fc1 pre-activation accumulator
    ctx_heads = []
    for hd in range(n_heads):                    # tiny static head loop
        q = qkv[:, hd * dk_pad:(hd + 1) * dk_pad]                 # 32-aligned
        k = qkv[:, hdk + hd * dk_pad: hdk + (hd + 1) * dk_pad]
        v = qkv[:, 2 * hdk + hd * dv_pad: 2 * hdk + (hd + 1) * dv_pad]
        qh = q.reshape(bt, L, dk_pad).astype(compute_dtype)
        kh = k.reshape(bt, L, dk_pad).astype(compute_dtype)
        vh = v.reshape(bt, L, dv_pad).astype(compute_dtype)
        # Q @ K^T (padded zero lanes contribute nothing).
        s = jnp.einsum('bqd,bkd->bqk', qh, kh,
                       preferred_element_type=f32) * scale        # (bt, L, L)
        s = jnp.exp(s) * key_mask                                 # mask keys
        denom = jnp.sum(s, axis=-1, keepdims=True) + 1e-8
        attn = s * pl.reciprocal(denom, approx=True)              # EUP, not VALU
        ctx_h = jnp.einsum('bqk,bkd->bqd', attn.astype(compute_dtype), vh,
                           preferred_element_type=f32)            # (bt, L, dv_pad)
        ctx_heads.append(ctx_h)
        # additive-attention fc1 contribution of this head (no ctx concat)
        e_pre = e_pre + jnp.dot(ctx_h.reshape(rows, dv_pad).astype(compute_dtype),
                                w1_ref[hd * dv_pad:(hd + 1) * dv_pad, :],
                                preferred_element_type=f32)       # (rows, Hq)

    # ---- additive-attention pooling, fused in VMEM ----
    e = jnp.tanh(e_pre + b1_ref[...])                             # (rows, Hq) f32
    # fc2 (Hq -> 1) as VPU multiply + lane reduction (no M x 1 MXU pass)
    logits = jnp.sum(e * w2_ref[...], axis=-1, keepdims=True) + b2_ref[...]
    alpha = jnp.exp(logits).reshape(bt, L, 1) * tok_mask          # (bt, L, 1)
    asum = jnp.sum(alpha, axis=1, keepdims=True) + 1e-8           # (bt, 1, 1)
    alpha = alpha * pl.reciprocal(asum, approx=True)

    # Pool over L: direct contraction, assembled into one dense lane-padded store.
    pooled = [jnp.sum(ctx_heads[hd] * alpha, axis=1) for hd in range(n_heads)]
    if out_pad > hdv:
        pooled.append(jnp.zeros((bt, out_pad - hdv), dtype=f32))
    out_ref[...] = jnp.concatenate(pooled, axis=-1)               # (bt, out_pad)


def text_encoder_forward(h, token_masks, wqkv, bqkv, w1, b1, w2, b2,
                         *, n_heads, d_k, d_v, dk_pad, dv_pad,
                         compute_dtype=jnp.bfloat16, target_rows=2048,
                         vmem_limit_bytes=48 * 1024 * 1024):
    B, L, D = h.shape
    wtot = wqkv.shape[1]
    hq = w1.shape[1]
    hdv_pad = n_heads * dv_pad
    out_pad = _round_up(hdv_pad, 128)             # lane-dense output block
    bt = _pick_block_batch(B, L, target_rows)

    mask = token_masks.astype(jnp.float32)        # (B, L): one dense mask stream

    kernel = functools.partial(
        text_encoder_kernel, n_heads=n_heads, d_k=d_k,
        dk_pad=dk_pad, dv_pad=dv_pad, out_pad=out_pad, compute_dtype=compute_dtype)

    out = pl.pallas_call(
        kernel,
        out_shape=jax.ShapeDtypeStruct((B, out_pad), jnp.float32),
        grid_spec=pltpu.PrefetchScalarGridSpec(
            num_scalar_prefetch=0,
            grid=(B // bt,),
            in_specs=[
                pl.BlockSpec((bt, L, D), lambda i: (i, 0, 0)),
                pl.BlockSpec((bt, L), lambda i: (i, 0)),
                # weights/biases: constant index_map -> resident across steps
                pl.BlockSpec((D, wtot), lambda i: (0, 0)),
                pl.BlockSpec((1, wtot), lambda i: (0, 0)),
                pl.BlockSpec((hdv_pad, hq), lambda i: (0, 0)),
                pl.BlockSpec((1, hq), lambda i: (0, 0)),
                pl.BlockSpec((1, hq), lambda i: (0, 0)),
                pl.BlockSpec((1, 1), lambda i: (0, 0)),
            ],
            out_specs=pl.BlockSpec((bt, out_pad), lambda i: (i, 0)),
        ),
        compiler_params=pltpu.CompilerParams(
            dimension_semantics=("parallel",),      # shards steps across v7x's 2 TCs
            vmem_limit_bytes=vmem_limit_bytes,      # 48 MiB: safe on v7x's 64 MiB;
                                                    # raise toward ~96 MiB on v5e/v6e
        ),
    )(h, mask, wqkv, bqkv, w1, b1, w2, b2)

    # Strip per-head lane padding: (B, out_pad) -> (B, n_heads*d_v)
    out = out[:, :hdv_pad].reshape(B, n_heads, dv_pad)[:, :, :d_v]
    return out.reshape(B, n_heads * d_v)


# ---------------------------------------------------------------------------
# TextEncoder wrapper (parameter setup + glue in plain JAX)
# ---------------------------------------------------------------------------
class TextEncoderPallas:
    def __init__(self, key, *, vocab_size, bus_num, seg_num, word_embedding_dim,
                 num_attention_heads, query_vector_dim, dropout_rate,
                 compute_dtype=jnp.bfloat16):
        # TODO(synk): bus_num > 0 (bus/station masking + station_emb rewrite) not implemented.
        assert bus_num == 0, "bus_num>0 (bus/station) path not implemented"
        self.bus_num = bus_num
        self.seg_num = seg_num
        self.dropout_rate = dropout_rate          # F.dropout(training=False) -> identity
        self.n_heads = num_attention_heads
        self.d_k = 20
        self.d_v = 20
        # per-head dims zero-padded to a lane-friendly width -> 32-aligned slices
        self.dk_pad = _round_up(self.d_k, 32)
        self.dv_pad = _round_up(self.d_v, 32)
        self.compute_dtype = compute_dtype
        D = word_embedding_dim
        Hq = query_vector_dim
        nh = self.n_heads

        ks = jax.random.split(key, 11)

        def xavier(k, fan_in, fan_out):
            limit = math.sqrt(6.0 / (fan_in + fan_out))
            return jax.random.uniform(k, (fan_in, fan_out), jnp.float32, -limit, limit)

        def bias(k, fan_in, fan_out):
            limit = 1.0 / math.sqrt(fan_in)
            return jax.random.uniform(k, (1, fan_out), jnp.float32, -limit, limit)

        def pad_heads_cols(w, d, d_pad):
            # (rows, nh*d) -> (rows, nh*d_pad), zero-padding each head's tail
            r = w.shape[0]
            w = w.reshape(r, nh, d)
            w = jnp.pad(w, ((0, 0), (0, 0), (0, d_pad - d)))
            return w.reshape(r, nh * d_pad)

        # TODO(synk): bert_model is an external constructor argument with no
        # definition in this file; stand-in is a deterministic bf16 embedding lookup.
        self.emb = (0.02 * jax.random.normal(ks[0], (vocab_size, D),
                                             jnp.float32)).astype(compute_dtype)

        wq, bq = xavier(ks[1], D, nh * self.d_k), bias(ks[2], D, nh * self.d_k)
        wk, bk = xavier(ks[3], D, nh * self.d_k), bias(ks[4], D, nh * self.d_k)
        wv, bv = xavier(ks[5], D, nh * self.d_v), bias(ks[6], D, nh * self.d_v)
        # Fused, head-padded QKV weight/bias; cast to compute dtype ONCE here.
        self.wqkv = jnp.concatenate(
            [pad_heads_cols(wq, self.d_k, self.dk_pad),
             pad_heads_cols(wk, self.d_k, self.dk_pad),
             pad_heads_cols(wv, self.d_v, self.dv_pad)], axis=1).astype(compute_dtype)
        self.bqkv = jnp.concatenate(
            [pad_heads_cols(bq, self.d_k, self.dk_pad),
             pad_heads_cols(bk, self.d_k, self.dk_pad),
             pad_heads_cols(bv, self.d_v, self.dv_pad)], axis=1).astype(jnp.float32)

        w1 = xavier(ks[7], nh * self.d_v, Hq)
        # pad fc1 rows to the padded per-head ctx layout (zero rows for pad lanes)
        w1 = jnp.pad(w1.reshape(nh, self.d_v, Hq),
                     ((0, 0), (0, self.dv_pad - self.d_v), (0, 0)))
        self.w1 = w1.reshape(nh * self.dv_pad, Hq).astype(compute_dtype)
        self.b1 = bias(ks[8], nh * self.d_v, Hq)
        # fc2 stored transposed as (1, Hq): applied as VPU mul + lane reduction
        self.w2 = xavier(ks[9], Hq, 1).reshape(1, Hq)
        self.b2 = bias(ks[10], Hq, 1)

    def __call__(self, segments, token_masks, seg_masks):
        batch_seg_num, seq_length = segments.shape
        batch_size, seg_num = seg_masks.shape

        # bert_model stand-in -> last_hidden_states (batch_seg_num, L, D), bf16
        h = self.emb[segments]

        # F.dropout(..., training=False) -> identity; fused MHA + pooling kernel.
        vec = text_encoder_forward(
            h, token_masks,
            self.wqkv, self.bqkv, self.w1, self.b1, self.w2, self.b2,
            n_heads=self.n_heads, d_k=self.d_k, d_v=self.d_v,
            dk_pad=self.dk_pad, dv_pad=self.dv_pad,
            compute_dtype=self.compute_dtype)                 # (B, n_heads*d_v)

        return vec.reshape(batch_size, seg_num, -1)


if __name__ == "__main__":
    key = jax.random.PRNGKey(0)
    k_model, k_seg, k_mask = jax.random.split(key, 3)

    batch_size, seg_num, seq_length = 2, 4, 8
    word_embedding_dim, num_attention_heads, query_vector_dim = 32, 2, 32
    vocab_size = 100
    batch_seg_num = batch_size * seg_num

    encoder = TextEncoderPallas(
        k_model, vocab_size=vocab_size, bus_num=0, seg_num=seg_num,
        word_embedding_dim=word_embedding_dim,
        num_attention_heads=num_attention_heads,
        query_vector_dim=query_vector_dim, dropout_rate=0.2)

    segments = jax.random.randint(k_seg, (batch_seg_num, seq_length), 0, vocab_size)
    token_masks = jax.random.bernoulli(
        k_mask, 0.8, (batch_seg_num, seq_length)).astype(jnp.int32)
    token_masks = token_masks.at[:, 0].set(1)           # at least one valid token
    seg_masks = jnp.ones((batch_size, seg_num), jnp.int32)

    text_vectors = encoder(segments, token_masks, seg_masks)
    jax.block_until_ready(text_vectors)
    assert text_vectors.shape == (batch_size, seg_num, num_attention_heads * 20)
    assert bool(jnp.all(jnp.isfinite(text_vectors)))
    print("KERNEL_OK")
</pallas_src>

<mosaic_0001>
module attributes {stable_mosaic.version = 11 : i64} {
  func.func @text_encoder_kernel(%arg0: i32, %arg1: memref<8x8x32xbf16, #tpu.memory_space<vmem>>, %arg2: memref<8x8xf32, #tpu.memory_space<vmem>>, %arg3: memref<32x192xbf16, #tpu.memory_space<vmem>>, %arg4: memref<1x192xf32, #tpu.memory_space<vmem>>, %arg5: memref<64x32xbf16, #tpu.memory_space<vmem>>, %arg6: memref<1x32xf32, #tpu.memory_space<vmem>>, %arg7: memref<1x32xf32, #tpu.memory_space<vmem>>, %arg8: memref<1x1xf32, #tpu.memory_space<vmem>>, %arg9: memref<8x128xf32, #tpu.memory_space<vmem>>) attributes {dimension_semantics = [#tpu.dimension_semantics<parallel>], iteration_bounds = array<i64: 1>, scalar_prefetch = 0 : i64, scratch_operands = 0 : i64, tpu.core_type = #tpu.core_type<tc>, window_params = [{transform_indices = @transform_0, window_bounds = array<i64: 8, 8, 32>}, {transform_indices = @transform_1, window_bounds = array<i64: 8, 8>}, {pipeline_mode = #tpu.pipeline_mode<synchronous>, transform_indices = @transform_2, window_bounds = array<i64: 32, 192>}, {pipeline_mode = #tpu.pipeline_mode<synchronous>, transform_indices = @transform_3, window_bounds = array<i64: 1, 192>}, {pipeline_mode = #tpu.pipeline_mode<synchronous>, transform_indices = @transform_4, window_bounds = array<i64: 64, 32>}, {pipeline_mode = #tpu.pipeline_mode<synchronous>, transform_indices = @transform_5, window_bounds = array<i64: 1, 32>}, {pipeline_mode = #tpu.pipeline_mode<synchronous>, transform_indices = @transform_6, window_bounds = array<i64: 1, 32>}, {pipeline_mode = #tpu.pipeline_mode<synchronous>, transform_indices = @transform_7, window_bounds = array<i64: 1, 1>}, {transform_indices = @transform_8, window_bounds = array<i64: 8, 128>}]} {
    %c0 = arith.constant 0 : index
    %c0_0 = arith.constant 0 : index
    %0 = vector.load %arg2[%c0, %c0_0] : memref<8x8xf32, #tpu.memory_space<vmem>>, vector<8x8xf32>
    %1 = vector.shape_cast %0 : vector<8x8xf32> to vector<8x1x8xf32>
    %2 = vector.shape_cast %0 : vector<8x8xf32> to vector<8x8x1xf32>
    %c0_1 = arith.constant 0 : index
    %c0_2 = arith.constant 0 : index
    %c0_3 = arith.constant 0 : index
    %3 = vector.load %arg1[%c0_1, %c0_2, %c0_3] : memref<8x8x32xbf16, #tpu.memory_space<vmem>>, vector<8x8x32xbf16>
    %4 = vector.shape_cast %3 : vector<8x8x32xbf16> to vector<64x32xbf16>
    %c0_4 = arith.constant 0 : index
    %c0_5 = arith.constant 0 : index
    %5 = vector.load %arg3[%c0_4, %c0_5] : memref<32x192xbf16, #tpu.memory_space<vmem>>, vector<32x192xbf16>
    %cst = arith.constant dense<0.000000e+00> : vector<64x192xf32>
    %6 = tpu.matmul %4, %5, %cst {dimension_numbers = #tpu.dot_dimension_numbers<[1], [0], [0], [1], [0, 0, 1, 1], [], []>} : vector<64x32xbf16>, vector<32x192xbf16>, vector<64x192xf32> -> vector<64x192xf32>
    %c0_6 = arith.constant 0 : index
    %c0_7 = arith.constant 0 : index
    %7 = vector.load %arg4[%c0_6, %c0_7] : memref<1x192xf32, #tpu.memory_space<vmem>>, vector<1x192xf32>
    %8 = vector.broadcast %7 : vector<1x192xf32> to vector<64x192xf32>
    %9 = arith.addf %6, %8 : vector<64x192xf32>
    %cst_8 = arith.constant 0.000000e+00 : f32
    %10 = vector.broadcast %cst_8 : f32 to vector<64x32xf32>
    %11 = vector.extract_strided_slice %9 {offsets = [0, 0], sizes = [64, 32], strides = [1, 1]} : vector<64x192xf32> to vector<64x32xf32>
    %12 = vector.extract_strided_slice %9 {offsets = [0, 64], sizes = [64, 32], strides = [1, 1]} : vector<64x192xf32> to vector<64x32xf32>
    %13 = vector.extract_strided_slice %9 {offsets = [0, 128], sizes = [64, 32], strides = [1, 1]} : vector<64x192xf32> to vector<64x32xf32>
    %14 = vector.shape_cast %11 : vector<64x32xf32> to vector<8x8x32xf32>
    %15 = arith.truncf %14 : vector<8x8x32xf32> to vector<8x8x32xbf16>
    %16 = vector.shape_cast %12 : vector<64x32xf32> to vector<8x8x32xf32>
    %17 = arith.truncf %16 : vector<8x8x32xf32> to vector<8x8x32xbf16>
    %18 = vector.shape_cast %13 : vector<64x32xf32> to vector<8x8x32xf32>
    %19 = arith.truncf %18 : vector<8x8x32xf32> to vector<8x8x32xbf16>
    "tpu.trace_start"() <{level = 10 : i32, message = "bqd,bkd->bqk"}> : () -> ()
    %cst_9 = arith.constant dense<0.000000e+00> : vector<8x8x8xf32>
    %20 = tpu.matmul %15, %17, %cst_9 {dimension_numbers = #tpu.dot_dimension_numbers<[2], [2], [1], [1], [0, 0, 0, 1, 1, 1], [0], [0]>} : vector<8x8x32xbf16>, vector<8x8x32xbf16>, vector<8x8x8xf32> -> vector<8x8x8xf32>
    "tpu.trace_stop"() : () -> ()
    %cst_10 = arith.constant 0.223606795 : f32
    %21 = vector.broadcast %cst_10 : f32 to vector<8x8x8xf32>
    %22 = arith.mulf %20, %21 : vector<8x8x8xf32>
    %23 = math.exp %22 : vector<8x8x8xf32>
    %24 = vector.broadcast %1 : vector<8x1x8xf32> to vector<8x8x8xf32>
    %25 = arith.mulf %23, %24 : vector<8x8x8xf32>
    %cst_11 = arith.constant dense<0.000000e+00> : vector<8x8xf32>
    %26 = vector.multi_reduction <add>, %25, %cst_11 [2] : vector<8x8x8xf32> to vector<8x8xf32>
    %27 = vector.shape_cast %26 : vector<8x8xf32> to vector<8x8x1xf32>
    %cst_12 = arith.constant 9.99999993E-9 : f32
    %28 = vector.broadcast %cst_12 : f32 to vector<8x8x1xf32>
    %29 = arith.addf %27, %28 : vector<8x8x1xf32>
    %30 = tpu.reciprocal %29 {approx = true} : vector<8x8x1xf32> -> vector<8x8x1xf32>
    %31 = vector.broadcast %30 : vector<8x8x1xf32> to vector<8x8x8xf32>
    %32 = arith.mulf %25, %31 : vector<8x8x8xf32>
    %33 = arith.truncf %32 : vector<8x8x8xf32> to vector<8x8x8xbf16>
    "tpu.trace_start"() <{level = 10 : i32, message = "bqk,bkd->bqd"}> : () -> ()
    %cst_13 = arith.constant dense<0.000000e+00> : vector<8x8x32xf32>
    %34 = tpu.matmul %33, %19, %cst_13 {dimension_numbers = #tpu.dot_dimension_numbers<[2], [1], [1], [2], [0, 0, 0, 1, 1, 2], [0], [0]>} : vector<8x8x8xbf16>, vector<8x8x32xbf16>, vector<8x8x32xf32> -> vector<8x8x32xf32>
    "tpu.trace_stop"() : () -> ()
    %35 = vector.shape_cast %34 : vector<8x8x32xf32> to vector<64x32xf32>
    %36 = arith.truncf %35 : vector<64x32xf32> to vector<64x32xbf16>
    %c0_14 = arith.constant 0 : index
    %c0_15 = arith.constant 0 : index
    %37 = vector.load %arg5[%c0_14, %c0_15] : memref<64x32xbf16, #tpu.memory_space<vmem>>, vector<32x32xbf16>
    %cst_16 = arith.constant dense<0.000000e+00> : vector<64x32xf32>
    %38 = tpu.matmul %36, %37, %cst_16 {dimension_numbers = #tpu.dot_dimension_numbers<[1], [0], [0], [1], [0, 0, 1, 1], [], []>} : vector<64x32xbf16>, vector<32x32xbf16>, vector<64x32xf32> -> vector<64x32xf32>
    %39 = arith.addf %10, %38 : vector<64x32xf32>
    %40 = vector.extract_strided_slice %9 {offsets = [0, 32], sizes = [64, 32], strides = [1, 1]} : vector<64x192xf32> to vector<64x32xf32>
    %41 = vector.extract_strided_slice %9 {offsets = [0, 96], sizes = [64, 32], strides = [1, 1]} : vector<64x192xf32> to vector<64x32xf32>
    %42 = vector.extract_strided_slice %9 {offsets = [0, 160], sizes = [64, 32], strides = [1, 1]} : vector<64x192xf32> to vector<64x32xf32>
    %43 = vector.shape_cast %40 : vector<64x32xf32> to vector<8x8x32xf32>
    %44 = arith.truncf %43 : vector<8x8x32xf32> to vector<8x8x32xbf16>
    %45 = vector.shape_cast %41 : vector<64x32xf32> to vector<8x8x32xf32>
    %46 = arith.truncf %45 : vector<8x8x32xf32> to vector<8x8x32xbf16>
    %47 = vector.shape_cast %42 : vector<64x32xf32> to vector<8x8x32xf32>
    %48 = arith.truncf %47 : vector<8x8x32xf32> to vector<8x8x32xbf16>
    "tpu.trace_start"() <{level = 10 : i32, message = "bqd,bkd->bqk"}> : () -> ()
    %cst_17 = arith.constant dense<0.000000e+00> : vector<8x8x8xf32>
    %49 = tpu.matmul %44, %46, %cst_17 {dimension_numbers = #tpu.dot_dimension_numbers<[2], [2], [1], [1], [0, 0, 0, 1, 1, 1], [0], [0]>} : vector<8x8x32xbf16>, vector<8x8x32xbf16>, vector<8x8x8xf32> -> vector<8x8x8xf32>
    "tpu.trace_stop"() : () -> ()
    %cst_18 = arith.constant 0.223606795 : f32
    %50 = vector.broadcast %cst_18 : f32 to vector<8x8x8xf32>
    %51 = arith.mulf %49, %50 : vector<8x8x8xf32>
    %52 = math.exp %51 : vector<8x8x8xf32>
    %53 = vector.broadcast %1 : vector<8x1x8xf32> to vector<8x8x8xf32>
    %54 = arith.mulf %52, %53 : vector<8x8x8xf32>
    %cst_19 = arith.constant dense<0.000000e+00> : vector<8x8xf32>
    %55 = vector.multi_reduction <add>, %54, %cst_19 [2] : vector<8x8x8xf32> to vector<8x8xf32>
    %56 = vector.shape_cast %55 : vector<8x8xf32> to vector<8x8x1xf32>
    %cst_20 = arith.constant 9.99999993E-9 : f32
    %57 = vector.broadcast %cst_20 : f32 to vector<8x8x1xf32>
    %58 = arith.addf %56, %57 : vector<8x8x1xf32>
    %59 = tpu.reciprocal %58 {approx = true} : vector<8x8x1xf32> -> vector<8x8x1xf32>
    %60 = vector.broadcast %59 : vector<8x8x1xf32> to vector<8x8x8xf32>
    %61 = arith.mulf %54, %60 : vector<8x8x8xf32>
    %62 = arith.truncf %61 : vector<8x8x8xf32> to vector<8x8x8xbf16>
    "tpu.trace_start"() <{level = 10 : i32, message = "bqk,bkd->bqd"}> : () -> ()
    %cst_21 = arith.constant dense<0.000000e+00> : vector<8x8x32xf32>
    %63 = tpu.matmul %62, %48, %cst_21 {dimension_numbers = #tpu.dot_dimension_numbers<[2], [1], [1], [2], [0, 0, 0, 1, 1, 2], [0], [0]>} : vector<8x8x8xbf16>, vector<8x8x32xbf16>, vector<8x8x32xf32> -> vector<8x8x32xf32>
    "tpu.trace_stop"() : () -> ()
    %64 = vector.shape_cast %63 : vector<8x8x32xf32> to vector<64x32xf32>
    %65 = arith.truncf %64 : vector<64x32xf32> to vector<64x32xbf16>
    %c32 = arith.constant 32 : index
    %c0_22 = arith.constant 0 : index
    %66 = vector.load %arg5[%c32, %c0_22] : memref<64x32xbf16, #tpu.memory_space<vmem>>, vector<32x32xbf16>
    %cst_23 = arith.constant dense<0.000000e+00> : vector<64x32xf32>
    %67 = tpu.matmul %65, %66, %cst_23 {dimension_numbers = #tpu.dot_dimension_numbers<[1], [0], [0], [1], [0, 0, 1, 1], [], []>} : vector<64x32xbf16>, vector<32x32xbf16>, vector<64x32xf32> -> vector<64x32xf32>
    %68 = arith.addf %39, %67 : vector<64x32xf32>
    %c0_24 = arith.constant 0 : index
    %c0_25 = arith.constant 0 : index
    %69 = vector.load %arg6[%c0_24, %c0_25] : memref<1x32xf32, #tpu.memory_space<vmem>>, vector<1x32xf32>
    %70 = vector.broadcast %69 : vector<1x32xf32> to vector<64x32xf32>
    %71 = arith.addf %68, %70 : vector<64x32xf32>
    %72 = math.tanh %71 : vector<64x32xf32>
    %c0_26 = arith.constant 0 : index
    %c0_27 = arith.constant 0 : index
    %73 = vector.load %arg7[%c0_26, %c0_27] : memref<1x32xf32, #tpu.memory_space<vmem>>, vector<1x32xf32>
    %74 = vector.broadcast %73 : vector<1x32xf32> to vector<64x32xf32>
    %75 = arith.mulf %72, %74 : vector<64x32xf32>
    %cst_28 = arith.constant dense<0.000000e+00> : vector<64xf32>
    %76 = vector.multi_reduction <add>, %75, %cst_28 [1] : vector<64x32xf32> to vector<64xf32>
    %77 = vector.shape_cast %76 : vector<64xf32> to vector<64x1xf32>
    %c0_29 = arith.constant 0 : index
    %c0_30 = arith.constant 0 : index
    %78 = vector.load %arg8[%c0_29, %c0_30] : memref<1x1xf32, #tpu.memory_space<vmem>>, vector<1x1xf32>
    %79 = vector.broadcast %78 : vector<1x1xf32> to vector<64x1xf32>
    %80 = arith.addf %77, %79 : vector<64x1xf32>
    %81 = math.exp %80 : vector<64x1xf32>
    %82 = vector.shape_cast %81 : vector<64x1xf32> to vector<8x8x1xf32>
    %83 = arith.mulf %82, %2 : vector<8x8x1xf32>
    %cst_31 = arith.constant dense<0.000000e+00> : vector<8x1xf32>
    %84 = vector.multi_reduction <add>, %83, %cst_31 [1] : vector<8x8x1xf32> to vector<8x1xf32>
    %85 = vector.shape_cast %84 : vector<8x1xf32> to vector<8x1x1xf32>
    %cst_32 = arith.constant 9.99999993E-9 : f32
    %86 = vector.broadcast %cst_32 : f32 to vector<8x1x1xf32>
    %87 = arith.addf %85, %86 : vector<8x1x1xf32>
    %88 = tpu.reciprocal %87 {approx = true} : vector<8x1x1xf32> -> vector<8x1x1xf32>
    %89 = vector.broadcast %88 : vector<8x1x1xf32> to vector<8x8x1xf32>
    %90 = arith.mulf %83, %89 : vector<8x8x1xf32>
    %91 = vector.broadcast %90 : vector<8x8x1xf32> to vector<8x8x32xf32>
    %92 = arith.mulf %34, %91 : vector<8x8x32xf32>
    %cst_33 = arith.constant dense<0.000000e+00> : vector<8x32xf32>
    %93 = vector.multi_reduction <add>, %92, %cst_33 [1] : vector<8x8x32xf32> to vector<8x32xf32>
    %94 = vector.broadcast %90 : vector<8x8x1xf32> to vector<8x8x32xf32>
    %95 = arith.mulf %63, %94 : vector<8x8x32xf32>
    %cst_34 = arith.constant dense<0.000000e+00> : vector<8x32xf32>
    %96 = vector.multi_reduction <add>, %95, %cst_34 [1] : vector<8x8x32xf32> to vector<8x32xf32>
    %cst_35 = arith.constant 0.000000e+00 : f32
    %97 = vector.broadcast %cst_35 : f32 to vector<8x64xf32>
    %98 = tpu.concatenate %93, %96, %97 in 1 : vector<8x32xf32>, vector<8x32xf32>, vector<8x64xf32> -> vector<8x128xf32>
    %c0_36 = arith.constant 0 : index
    %c0_37 = arith.constant 0 : index
    %99 = vector.load %arg9[%c0_36, %c0_37] : memref<8x128xf32, #tpu.memory_space<vmem>>, vector<8x128xf32>
    tpu.vector_store %arg9[%c0_36, %c0_37], %98 {strides = array<i32>} : memref<8x128xf32, #tpu.memory_space<vmem>>, vector<8x128xf32>,
    return
  }
  func.func @transform_0(%arg0: i32) -> (i32, i32, i32) {
    %c0_i32 = arith.constant 0 : i32
    %c0_i32_0 = arith.constant 0 : i32
    %c0_i32_1 = arith.constant 0 : i32
    return %arg0, %c0_i32, %c0_i32_0 : i32, i32, i32
  }
  func.func @transform_1(%arg0: i32) -> (i32, i32) {
    %c0_i32 = arith.constant 0 : i32
    %c0_i32_0 = arith.constant 0 : i32
    return %arg0, %c0_i32 : i32, i32
  }
  func.func @transform_2(%arg0: i32) -> (i32, i32) {
    %c0_i32 = arith.constant 0 : i32
    %c0_i32_0 = arith.constant 0 : i32
    %c0_i32_1 = arith.constant 0 : i32
    return %c0_i32, %c0_i32_0 : i32, i32
  }
  func.func @transform_3(%arg0: i32) -> (i32, i32) {
    %c0_i32 = arith.constant 0 : i32
    %c0_i32_0 = arith.constant 0 : i32
    %c0_i32_1 = arith.constant 0 : i32
    return %c0_i32, %c0_i32_0 : i32, i32
  }
  func.func @transform_4(%arg0: i32) -> (i32, i32) {
    %c0_i32 = arith.constant 0 : i32
    %c0_i32_0 = arith.constant 0 : i32
    %c0_i32_1 = arith.constant 0 : i32
    return %c0_i32, %c0_i32_0 : i32, i32
  }
  func.func @transform_5(%arg0: i32) -> (i32, i32) {
    %c0_i32 = arith.constant 0 : i32
    %c0_i32_0 = arith.constant 0 : i32
    %c0_i32_1 = arith.constant 0 : i32
    return %c0_i32, %c0_i32_0 : i32, i32
  }
  func.func @transform_6(%arg0: i32) -> (i32, i32) {
    %c0_i32 = arith.constant 0 : i32
    %c0_i32_0 = arith.constant 0 : i32
    %c0_i32_1 = arith.constant 0 : i32
    return %c0_i32, %c0_i32_0 : i32, i32
  }
  func.func @transform_7(%arg0: i32) -> (i32, i32) {
    %c0_i32 = arith.constant 0 : i32
    %c0_i32_0 = arith.constant 0 : i32
    %c0_i32_1 = arith.constant 0 : i32
    return %c0_i32, %c0_i32_0 : i32, i32
  }
  func.func @transform_8(%arg0: i32) -> (i32, i32) {
    %c0_i32 = arith.constant 0 : i32
    %c0_i32_0 = arith.constant 0 : i32
    return %arg0, %c0_i32 : i32, i32
  }
}

</mosaic_0001>

<llo_original>
// kernel: tpu_custom_call.1
$region0: #{tpu_custom_call.1}
  #allocation0 [shape = 'u32[]', space=smem, size = 0x4, offset = 0x4, fixed_abs, tag = 'smem constant byte address 0x4 - core index']
  #allocation1 [shape = 'u32[144,128]{1,0:T(1,128)}', space=vmem, size = 0x12000, scoped, tag = 'internal scratch']
  #allocation2 [shape = 'f32[1,1]{1,0:T(1,128)S(1)}', space=vmem, size = 0x200, scoped, tag = 'scoped memory for tpu_custom_call.1']
  %s0 = inlined_call_operand.vmem [shape: bf16[8,8,32], index: 0, kind: input, shape index: {}]
  %s1 = inlined_call_operand.vmem [shape: f32[8,8], index: 1, kind: input, shape index: {}]
  %s2 = inlined_call_operand.hbm [shape: bf16[32,192], index: 2, kind: input, shape index: {}]
  %s3 = inlined_call_operand.vmem [shape: f32[1,192], index: 3, kind: input, shape index: {}]
  %s4 = inlined_call_operand.vmem [shape: bf16[64,32], index: 4, kind: input, shape index: {}]
  %s5 = inlined_call_operand.vmem [shape: f32[1,32], index: 5, kind: input, shape index: {}]
  %s6 = inlined_call_operand.vmem [shape: f32[1,32], index: 6, kind: input, shape index: {}]
  %s7 = inlined_call_operand.<no memory space> [shape: f32[1,1], index: 7, kind: input, shape index: {}]
  %s8 = inlined_call_operand.hbm [shape: f32[8,128], index: 8, kind: output, shape index: {}]
  %s9 = sld [smem:[#allocation0]]
  $region46: #{tpu_custom_call.1} parent=0
    _
  %s11 = ssub.s32 1, %s9
  %s12 = scalar_select 0, %s11, %s9
  %v13 = vstv %s7
  %14 = vst [vmem:[#allocation2] sm:$0x1] %v13
  $region1: #{tpu_custom_call.1} parent=0
    #allocation3 [shape = 'u8[16384]{0}', space=vmem, size = 0x4000, scoped, tag = 'input window, operand 2, single buffered']
    #allocation4 [shape = 's32[1]{0}', space=sflag, size = 0x4, scoped, tag = 'scoped memory for tpu_custom_call.1']
    #allocation5 [shape = 's32[1]{0}', space=sflag, size = 0x4, scoped, tag = 'scoped memory for tpu_custom_call.1']
    #allocation6 [shape = 'u8[4096]{0}', space=vmem, size = 0x1000, scoped, tag = 'output window, operand 0, single buffered']
    %15 = vsyncpa [#allocation4], 0
    %16 = vsyncpa [#allocation5], 0
    // Predicated region
    $region2: #{tpu_custom_call.1} parent=1 // pred_check
      _
    $region3: #{tpu_custom_call.1} parent=1 // pred_check_branch
      %18 = sbr.rel (0) target = $region5
    $region4: #{tpu_custom_call.1} parent=1 // pred_region
      _
    $region5: #{tpu_custom_call.1} parent=1 // pred_fallthru
      _
    // Predicated region
    $region6: #{tpu_custom_call.1} parent=1 // pred_check
      _
    $region7: #{tpu_custom_call.1} parent=1 // pred_check_branch
      %20 = sbr.rel (0) target = $region9
    $region8: #{tpu_custom_call.1} parent=1 // pred_region
      _
    $region9: #{tpu_custom_call.1} parent=1 // pred_fallthru
      _
    // Predicated region
    $region10: #{tpu_custom_call.1} parent=1 // pred_check
      _
    $region11: #{tpu_custom_call.1} parent=1 // pred_check_branch
      %22 = sbr.rel (0) target = $region13
    $region12: #{tpu_custom_call.1} parent=1 // pred_region
      %s24 = ssub.s32 512, 512
      %25 = vsyncadd [#allocation4], %s24
      %s26 = sshll.u32 [#allocation3], 4
      %s27 = int_to_ptr.vmem [resolvable:$true] %s26
      %32 = dma.hbm_to_vmem [thread:$0]  %s2, 512, %s27, [#allocation4], 128, 128, 8
    $region13: #{tpu_custom_call.1} parent=1 // pred_fallthru
      _
    // Predicated region
    $region14: #{tpu_custom_call.1} parent=1 // pred_check
      _
    $region15: #{tpu_custom_call.1} parent=1 // pred_check_branch
      %34 = sbr.rel (0) target = $region17
    $region16: #{tpu_custom_call.1} parent=1 // pred_region
      _
    $region17: #{tpu_custom_call.1} parent=1 // pred_fallthru
      _
    // Predicated region
    $region18: #{tpu_custom_call.1} parent=1 // pred_check
      _
    $region19: #{tpu_custom_call.1} parent=1 // pred_check_branch
      %36 = sbr.rel (0) target = $region21
    $region20: #{tpu_custom_call.1} parent=1 // pred_region
      _
    $region21: #{tpu_custom_call.1} parent=1 // pred_fallthru
      _
    // Predicated region
    $region22: #{tpu_custom_call.1} parent=1 // pred_check
      _
    $region23: #{tpu_custom_call.1} parent=1 // pred_check_branch
      %38 = sbr.rel (0) target = $region25
    $region24: #{tpu_custom_call.1} parent=1 // pred_region
      _
    $region25: #{tpu_custom_call.1} parent=1 // pred_fallthru
      _
    // Predicated region
    $region26: #{tpu_custom_call.1} parent=1 // pred_check
      _
    $region27: #{tpu_custom_call.1} parent=1 // pred_check_branch
      %40 = sbr.rel (0) target = $region29
    $region28: #{tpu_custom_call.1} parent=1 // pred_region
      _
    $region29: #{tpu_custom_call.1} parent=1 // pred_fallthru
      _
    // Predicated region
    $region30: #{tpu_custom_call.1} parent=1 // pred_check
      _
    $region31: #{tpu_custom_call.1} parent=1 // pred_check_branch
      %42 = sbr.rel (0) target = $region33
    $region32: #{tpu_custom_call.1} parent=1 // pred_region
      _
    $region33: #{tpu_custom_call.1} parent=1 // pred_fallthru
      _
    // Predicated region
    $region34: #{tpu_custom_call.1} parent=1 // pred_check
      _
    $region35: #{tpu_custom_call.1} parent=1 // pred_check_branch
      %44 = sbr.rel (0) target = $region37
    $region36: #{tpu_custom_call.1} parent=1 // pred_region
      %45 = dma.done [#allocation4], 512
    $region37: #{tpu_custom_call.1} parent=1 // pred_fallthru
      _
    %v47 = vld [vmem:[%s1] sm:$0xff]
    %v49 = vcombine.high %v47, %v47
    %v51 = vunpack.c.l.s4 1966171168
    %v52 = vunpack.c.0.s8 %v51
    %v53 = vlaneseq
    %v54 = vshrl.u32 %v53, 7
    %v55 = vsub.s32 %v52, %v54
    %v56 = vrot.slane %v47, %v55
    %v58 = vunpack.c.l.s4 1966171168
    %v59 = vunpack.c.0.s8 %v58
    %v60 = vlaneseq
    %v61 = vshrl.u32 %v60, 7
    %v62 = vsub.s32 %v59, %v61
    %v63 = vrot.slane %v49, %v62
    %v64 = vcombine.high %v56, %v56
    %v65 = vcombine.high %v63, %v63
    %v67 = vunpack.c.l.s4 1966171168
    %v68 = vunpack.c.0.s8 %v67
    %v69 = vlaneseq
    %v70 = vshrl.u32 %v69, 7
    %v71 = vsub.s32 %v68, %v70
    %v72 = vrot.slane %v56, %v71
    %v74 = vunpack.c.l.s4 1966171168
    %v75 = vunpack.c.0.s8 %v74
    %v76 = vlaneseq
    %v77 = vshrl.u32 %v76, 7
    %v78 = vsub.s32 %v75, %v77
    %v79 = vrot.slane %v63, %v78
    %v81 = vunpack.c.l.s4 1966171168
    %v82 = vunpack.c.0.s8 %v81
    %v83 = vlaneseq
    %v84 = vshrl.u32 %v83, 7
    %v85 = vsub.s32 %v82, %v84
    %v86 = vrot.slane %v64, %v85
    %v88 = vunpack.c.l.s4 1966171168
    %v89 = vunpack.c.0.s8 %v88
    %v90 = vlaneseq
    %v91 = vshrl.u32 %v90, 7
    %v92 = vsub.s32 %v89, %v91
    %v93 = vrot.slane %v65, %v92
    %v94 = vcombine.high %v72, %v72
    %v95 = vcombine.high %v79, %v79
    %v96 = vcombine.high %v86, %v86
    %v97 = vcombine.high %v93, %v93
    %v98 = vlaneseq
    %v99 = vshrl.u32 %v98, 7
    %v100 = vsub.s32 0, %v99
    %v101 = vrot.slane %v47, %v100
    %103 = vbcast.lane.b32.xlu0 %v101, 256
    %v104 = vpop.permute.xlu0 %103
    %v105 = vlaneseq
    %v106 = vshrl.u32 %v105, 7
    %v107 = vsub.s32 1, %v106
    %v108 = vrot.slane %v47, %v107
    %110 = vbcast.lane.b32.xlu0 %v108, 256
    %v111 = vpop.permute.xlu0 %110
    %v112 = vlaneseq
    %v113 = vshrl.u32 %v112, 7
    %v114 = vsub.s32 2, %v113
    %v115 = vrot.slane %v47, %v114
    %117 = vbcast.lane.b32.xlu0 %v115, 256
    %v118 = vpop.permute.xlu0 %117
    %v119 = vlaneseq
    %v120 = vshrl.u32 %v119, 7
    %v121 = vsub.s32 3, %v120
    %v122 = vrot.slane %v47, %v121
    %124 = vbcast.lane.b32.xlu0 %v122, 256
    %v125 = vpop.permute.xlu0 %124
    %v126 = vlaneseq
    %v127 = vshrl.u32 %v126, 7
    %v128 = vsub.s32 4, %v127
    %v129 = vrot.slane %v47, %v128
    %131 = vbcast.lane.b32.xlu0 %v129, 256
    %v132 = vpop.permute.xlu0 %131
    %v133 = vlaneseq
    %v134 = vshrl.u32 %v133, 7
    %v135 = vsub.s32 5, %v134
    %v136 = vrot.slane %v47, %v135
    %138 = vbcast.lane.b32.xlu0 %v136, 256
    %v139 = vpop.permute.xlu0 %138
    %v140 = vlaneseq
    %v141 = vshrl.u32 %v140, 7
    %v142 = vsub.s32 6, %v141
    %v143 = vrot.slane %v47, %v142
    %145 = vbcast.lane.b32.xlu0 %v143, 256
    %v146 = vpop.permute.xlu0 %145
    %v147 = vlaneseq
    %v148 = vshrl.u32 %v147, 7
    %v149 = vsub.s32 7, %v148
    %v150 = vrot.slane %v47, %v149
    %152 = vbcast.lane.b32.xlu0 %v150, 256
    %v153 = vpop.permute.xlu0 %152
    %v154 = vld [vmem:[%s0] sm:$0xf]
    %v155 = vld [vmem:[%s0 + $0x4] sm:$0xf]
    %v156 = vld [vmem:[%s0 + $0x8] sm:$0xf]
    %v157 = vld [vmem:[%s0 + $0xc] sm:$0xf]
    %v158 = vld [vmem:[%s0 + $0x10] sm:$0xf]
    %v159 = vld [vmem:[%s0 + $0x14] sm:$0xf]
    %v160 = vld [vmem:[%s0 + $0x18] sm:$0xf]
    %v161 = vld [vmem:[%s0 + $0x1c] sm:$0xf]
    %v162 = vld [vmem:[#allocation3] sm:$0xff]
    %v163 = vld [vmem:[#allocation3 + $0x8] sm:$0xff]
    %v164 = vld [vmem:[#allocation3 + $0x10] sm:$0xff]
    %v165 = vld [vmem:[#allocation3 + $0x18] sm:$0xff]
    %v166 = vld [vmem:[%s3] sm:$0x3]
    %v168 = vlaneseq
    %v169 = vshrl.u32 %v168, 7
    %v170 = vsub.s32 0, %v169
    %v171 = vrot.slane %v166, %v170
    %v172 = vlaneseq
    %v173 = vshrl.u32 %v172, 7
    %v174 = vsub.s32 1, %v173
    %v175 = vrot.slane %v166, %v174
    %v186 = vunpack.c.l.b16 %v154
    %v187 = vunpack.c.l.b16 %v155
    %v188 = vunpack.c.l.b16 %v156
    %v189 = vunpack.c.l.b16 %v157
    %v190 = vunpack.c.l.b16 %v158
    %v191 = vunpack.c.l.b16 %v159
    %v192 = vunpack.c.l.b16 %v160
    %v193 = vunpack.c.l.b16 %v161
    %v194 = vpack.c.b16 %v187, %v186
    %v195 = vpack.c.b16 %v189, %v188
    %v196 = vpack.c.b16 %v191, %v190
    %v197 = vpack.c.b16 %v193, %v192
    %v202 = vunpack.c.l.b16 %v162
    %v203 = vunpack.c.h.b16 %v162
    %v204 = vunpack.c.l.b16 %v163
    %v205 = vunpack.c.h.b16 %v163
    %v206 = vunpack.c.l.b16 %v164
    %v207 = vunpack.c.h.b16 %v164
    %v208 = vunpack.c.l.b16 %v165
    %v209 = vunpack.c.h.b16 %v165
    %v210 = vpack.c.b16 %v204, %v202
    %v211 = vpack.c.b16 %v205, %v203
    %v212 = vpack.c.b16 %v208, %v206
    %v213 = vpack.c.b16 %v209, %v207
    %vm218 = vcmask 261120
    %v220 = vsel %vm218, %v194, 0
    %v223 = vsel %vm218, %v195, 0
    %v226 = vsel %vm218, %v196, 0
    %v229 = vsel %vm218, %v197, 0
    %231 = vmatprep.subr.bf16.mxu0 %v211
    %232 = vmatpush1.bf16.msra.mxu0 %v210
    %233 = vmatprep.subr.bf16.mxu0 %v213
    %234 = vmatpush1.bf16.msra.mxu0 %v212
    %235 = vmatprep.subr.bf16.mxu0 0
    %236 = vmatpush1.bf16.msra.mxu0 0
    %237 = vmatprep.subr.bf16.mxu0 0
    %238 = vmatpush1.bf16.msra.mxu0 0
    %239 = vmatprep.subr.bf16.mxu0 0
    %240 = vmatpush1.bf16.msra.mxu0 0
    %241 = vmatprep.subr.bf16.mxu0 0
    %242 = vmatpush1.bf16.msra.mxu0 0
    %243 = vmatprep.subr.bf16.mxu0 0
    %244 = vmatpush1.bf16.msra.mxu0 0
    %245 = vmatprep.subr.bf16.mxu0 0
    %246 = vmatpush1.bf16.msra.mxu0 0
    %247 = vmatprep.subr.bf16.mxu0 0
    %248 = vmatpush1.bf16.msra.mxu0 0
    %249 = vmatprep.subr.bf16.mxu0 0
    %250 = vmatpush1.bf16.msra.mxu0 0
    %251 = vmatprep.subr.bf16.mxu0 0
    %252 = vmatpush1.bf16.msra.mxu0 0
    %253 = vmatprep.subr.bf16.mxu0 0
    %254 = vmatpush1.bf16.msra.mxu0 0
    %255 = vmatprep.subr.bf16.mxu0 0
    %256 = vmatpush1.bf16.msra.mxu0 0
    %257 = vmatprep.subr.bf16.mxu0 0
    %258 = vmatpush1.bf16.msra.mxu0 0
    %259 = vmatprep.subr.bf16.mxu0 0
    %260 = vmatpush1.bf16.msra.mxu0 0
    %261 = vmatprep.subr.bf16.mxu0 0
    %262 = vmatpush1.bf16.msra.mxu0 0
    %263 = vmatprep.mubr.bf16.mxu0 0
    %264 = vmatmul.mubr.bf16.gmra.mrb[0].mxu0 %v220
    %v265 = vpop.f32.mrb[0].mxu0
    %v266 = vadd.f32 %v171, %v265
    %v267 = vpop.f32.mrb[0].mxu0
    %v268 = vadd.f32 %v175, %v267
    %v269 = vpop.f32.mrb[0].mxu0
    %v270 = vadd.f32 %v171, %v269
    %v271 = vpop.f32.mrb[0].mxu0
    %v272 = vadd.f32 %v175, %v271
    %273 = vmatprep.mubr.bf16.mxu0 0
    %274 = vmatmul.mubr.bf16.gmra.mrb[0].mxu0 %v223
    %v275 = vpop.f32.mrb[0].mxu0
    %v276 = vadd.f32 %v171, %v275
    %v277 = vpop.f32.mrb[0].mxu0
    %v278 = vadd.f32 %v175, %v277
    %v279 = vpop.f32.mrb[0].mxu0
    %v280 = vadd.f32 %v171, %v279
    %v281 = vpop.f32.mrb[0].mxu0
    %v282 = vadd.f32 %v175, %v281
    %283 = vmatprep.mubr.bf16.mxu0 0
    %284 = vmatmul.mubr.bf16.gmra.mrb[0].mxu0 %v226
    %v285 = vpop.f32.mrb[0].mxu0
    %v286 = vadd.f32 %v171, %v285
    %v287 = vpop.f32.mrb[0].mxu0
    %v288 = vadd.f32 %v175, %v287
    %v289 = vpop.f32.mrb[0].mxu0
    %v290 = vadd.f32 %v171, %v289
    %v291 = vpop.f32.mrb[0].mxu0
    %v292 = vadd.f32 %v175, %v291
    %293 = vmatprep.mubr.bf16.mxu0 0
    %294 = vmatmul.mubr.bf16.gmra.mrb[0].mxu0 %v229
    %v295 = vpop.f32.mrb[0].mxu0
    %v296 = vadd.f32 %v171, %v295
    %v297 = vpop.f32.mrb[0].mxu0
    %v298 = vadd.f32 %v175, %v297
    %v299 = vpop.f32.mrb[0].mxu0
    %v300 = vadd.f32 %v171, %v299
    %v301 = vpop.f32.mrb[0].mxu0
    %v302 = vadd.f32 %v175, %v301
    %303 = vdwg.mxu0
    %v304 = vpack.c.bf16 %v266, %v266
    %v305 = vpack.c.bf16 %v270, %v270
    %v306 = vpack.c.bf16 %v276, %v276
    %v307 = vpack.c.bf16 %v280, %v280
    %v308 = vpack.c.bf16 %v286, %v286
    %v309 = vpack.c.bf16 %v290, %v290
    %v310 = vpack.c.bf16 %v296, %v296
    %v311 = vpack.c.bf16 %v300, %v300
    %v312 = vpack.c.bf16 %v268, %v268
    %v313 = vpack.c.bf16 %v272, %v272
    %v314 = vpack.c.bf16 %v278, %v278
    %v315 = vpack.c.bf16 %v282, %v282
    %v316 = vpack.c.bf16 %v288, %v288
    %v317 = vpack.c.bf16 %v292, %v292
    %v318 = vpack.c.bf16 %v298, %v298
    %v319 = vpack.c.bf16 %v302, %v302
    %321 = vrot.lane.b32.xlu0 %v304, 64
    %v322 = vpop.permute.xlu0 %321
    %v324 = vsel %vm218, %v304, 0
    %v327 = vsel %vm218, %v322, 0
    %329 = vmatprep.subr.bf16.mxu0 0
    %330 = vmatpush1.bf16.xpose.msra.mxu0 %v327
    %331 = vmatprep.subr.bf16.mxu0 0
    %332 = vmatpush1.bf16.xpose.msra.mxu0 0
    %333 = vmatprep.subr.bf16.mxu0 0
    %334 = vmatpush1.bf16.xpose.msra.mxu0 0
    %335 = vmatprep.subr.bf16.mxu0 0
    %336 = vmatpush1.bf16.xpose.msra.mxu0 0
    %337 = vmatprep.subr.bf16.mxu0 0
    %338 = vmatpush1.bf16.xpose.msra.mxu0 0
    %339 = vmatprep.subr.bf16.mxu0 0
    %340 = vmatpush1.bf16.xpose.msra.mxu0 0
    %341 = vmatprep.subr.bf16.mxu0 0
    %342 = vmatpush1.bf16.xpose.msra.mxu0 0
    %343 = vmatprep.subr.bf16.mxu0 0
    %344 = vmatpush1.bf16.xpose.msra.mxu0 0
    %345 = vmatprep.subr.bf16.mxu0 0
    %346 = vmatpush1.bf16.xpose.msra.mxu0 0
    %347 = vmatprep.subr.bf16.mxu0 0
    %348 = vmatpush1.bf16.xpose.msra.mxu0 0
    %349 = vmatprep.subr.bf16.mxu0 0
    %350 = vmatpush1.bf16.xpose.msra.mxu0 0
    %351 = vmatprep.subr.bf16.mxu0 0
    %352 = vmatpush1.bf16.xpose.msra.mxu0 0
    %353 = vmatprep.subr.bf16.mxu0 0
    %354 = vmatpush1.bf16.xpose.msra.mxu0 0
    %355 = vmatprep.subr.bf16.mxu0 0
    %356 = vmatpush1.bf16.xpose.msra.mxu0 0
    %357 = vmatprep.subr.bf16.mxu0 0
    %358 = vmatpush1.bf16.xpose.msra.mxu0 0
    %359 = vmatprep.subr.bf16.mxu0 0
    %360 = vmatpush1.bf16.xpose.msra.mxu0 0
    %361 = vmatprep.mubr.bf16.mxu0 0
    %362 = vmatmul.mubr.bf16.gmra.mrb[0].mxu0 %v324
    %v363 = vpop.f32.mrb[0].mxu0
    %v364 = vadd.f32 0.0, %v363
    %v365 = vpop.f32.mrb[0].mxu0
    %v366 = vpop.f32.mrb[0].mxu0
    %v367 = vpop.f32.mrb[0].mxu0
    %368 = vdwg.mxu0
    %370 = vrot.lane.b32.xlu0 %v305, 64
    %v371 = vpop.permute.xlu0 %370
    %v373 = vsel %vm218, %v305, 0
    %v376 = vsel %vm218, %v371, 0
    %378 = vmatprep.subr.bf16.mxu0 0
    %379 = vmatpush1.bf16.xpose.msra.mxu0 %v376
    %380 = vmatprep.subr.bf16.mxu0 0
    %381 = vmatpush1.bf16.xpose.msra.mxu0 0
    %382 = vmatprep.subr.bf16.mxu0 0
    %383 = vmatpush1.bf16.xpose.msra.mxu0 0
    %384 = vmatprep.subr.bf16.mxu0 0
    %385 = vmatpush1.bf16.xpose.msra.mxu0 0
    %386 = vmatprep.subr.bf16.mxu0 0
    %387 = vmatpush1.bf16.xpose.msra.mxu0 0
    %388 = vmatprep.subr.bf16.mxu0 0
    %389 = vmatpush1.bf16.xpose.msra.mxu0 0
    %390 = vmatprep.subr.bf16.mxu0 0
    %391 = vmatpush1.bf16.xpose.msra.mxu0 0
    %392 = vmatprep.subr.bf16.mxu0 0
    %393 = vmatpush1.bf16.xpose.msra.mxu0 0
    %394 = vmatprep.subr.bf16.mxu0 0
    %395 = vmatpush1.bf16.xpose.msra.mxu0 0
    %396 = vmatprep.subr.bf16.mxu0 0
    %397 = vmatpush1.bf16.xpose.msra.mxu0 0
    %398 = vmatprep.subr.bf16.mxu0 0
    %399 = vmatpush1.bf16.xpose.msra.mxu0 0
    %400 = vmatprep.subr.bf16.mxu0 0
    %401 = vmatpush1.bf16.xpose.msra.mxu0 0
    %402 = vmatprep.subr.bf16.mxu0 0
    %403 = vmatpush1.bf16.xpose.msra.mxu0 0
    %404 = vmatprep.subr.bf16.mxu0 0
    %405 = vmatpush1.bf16.xpose.msra.mxu0 0
    %406 = vmatprep.subr.bf16.mxu0 0
    %407 = vmatpush1.bf16.xpose.msra.mxu0 0
    %408 = vmatprep.subr.bf16.mxu0 0
    %409 = vmatpush1.bf16.xpose.msra.mxu0 0
    %410 = vmatprep.mubr.bf16.mxu0 0
    %411 = vmatmul.mubr.bf16.gmra.mrb[0].mxu0 %v373
    %v412 = vpop.f32.mrb[0].mxu0
    %v413 = vadd.f32 0.0, %v412
    %v414 = vpop.f32.mrb[0].mxu0
    %v415 = vpop.f32.mrb[0].mxu0
    %v416 = vpop.f32.mrb[0].mxu0
    %417 = vdwg.mxu0
    %419 = vrot.lane.b32.xlu0 %v306, 64
    %v420 = vpop.permute.xlu0 %419
    %v422 = vsel %vm218, %v306, 0
    %v425 = vsel %vm218, %v420, 0
    %427 = vmatprep.subr.bf16.mxu0 0
    %428 = vmatpush1.bf16.xpose.msra.mxu0 %v425
    %429 = vmatprep.subr.bf16.mxu0 0
    %430 = vmatpush1.bf16.xpose.msra.mxu0 0
    %431 = vmatprep.subr.bf16.mxu0 0
    %432 = vmatpush1.bf16.xpose.msra.mxu0 0
    %433 = vmatprep.subr.bf16.mxu0 0
    %434 = vmatpush1.bf16.xpose.msra.mxu0 0
    %435 = vmatprep.subr.bf16.mxu0 0
    %436 = vmatpush1.bf16.xpose.msra.mxu0 0
    %437 = vmatprep.subr.bf16.mxu0 0
    %438 = vmatpush1.bf16.xpose.msra.mxu0 0
    %439 = vmatprep.subr.bf16.mxu0 0
    %440 = vmatpush1.bf16.xpose.msra.mxu0 0
    %441 = vmatprep.subr.bf16.mxu0 0
    %442 = vmatpush1.bf16.xpose.msra.mxu0 0
    %443 = vmatprep.subr.bf16.mxu0 0
    %444 = vmatpush1.bf16.xpose.msra.mxu0 0
    %445 = vmatprep.subr.bf16.mxu0 0
    %446 = vmatpush1.bf16.xpose.msra.mxu0 0
    %447 = vmatprep.subr.bf16.mxu0 0
    %448 = vmatpush1.bf16.xpose.msra.mxu0 0
    %449 = vmatprep.subr.bf16.mxu0 0
    %450 = vmatpush1.bf16.xpose.msra.mxu0 0
    %451 = vmatprep.subr.bf16.mxu0 0
    %452 = vmatpush1.bf16.xpose.msra.mxu0 0
    %453 = vmatprep.subr.bf16.mxu0 0
    %454 = vmatpush1.bf16.xpose.msra.mxu0 0
    %455 = vmatprep.subr.bf16.mxu0 0
    %456 = vmatpush1.bf16.xpose.msra.mxu0 0
    %457 = vmatprep.subr.bf16.mxu0 0
    %458 = vmatpush1.bf16.xpose.msra.mxu0 0
    %459 = vmatprep.mubr.bf16.mxu0 0
    %460 = vmatmul.mubr.bf16.gmra.mrb[0].mxu0 %v422
    %v461 = vpop.f32.mrb[0].mxu0
    %v462 = vadd.f32 0.0, %v461
    %v463 = vpop.f32.mrb[0].mxu0
    %v464 = vpop.f32.mrb[0].mxu0
    %v465 = vpop.f32.mrb[0].mxu0
    %466 = vdwg.mxu0
    %468 = vrot.lane.b32.xlu0 %v307, 64
    %v469 = vpop.permute.xlu0 %468
    %v471 = vsel %vm218, %v307, 0
    %v474 = vsel %vm218, %v469, 0
    %476 = vmatprep.subr.bf16.mxu0 0
    %477 = vmatpush1.bf16.xpose.msra.mxu0 %v474
    %478 = vmatprep.subr.bf16.mxu0 0
    %479 = vmatpush1.bf16.xpose.msra.mxu0 0
    %480 = vmatprep.subr.bf16.mxu0 0
    %481 = vmatpush1.bf16.xpose.msra.mxu0 0
    %482 = vmatprep.subr.bf16.mxu0 0
    %483 = vmatpush1.bf16.xpose.msra.mxu0 0
    %484 = vmatprep.subr.bf16.mxu0 0
    %485 = vmatpush1.bf16.xpose.msra.mxu0 0
    %486 = vmatprep.subr.bf16.mxu0 0
    %487 = vmatpush1.bf16.xpose.msra.mxu0 0
    %488 = vmatprep.subr.bf16.mxu0 0
    %489 = vmatpush1.bf16.xpose.msra.mxu0 0
    %490 = vmatprep.subr.bf16.mxu0 0
    %491 = vmatpush1.bf16.xpose.msra.mxu0 0
    %492 = vmatprep.subr.bf16.mxu0 0
    %493 = vmatpush1.bf16.xpose.msra.mxu0 0
    %494 = vmatprep.subr.bf16.mxu0 0
    %495 = vmatpush1.bf16.xpose.msra.mxu0 0
    %496 = vmatprep.subr.bf16.mxu0 0
    %497 = vmatpush1.bf16.xpose.msra.mxu0 0
    %498 = vmatprep.subr.bf16.mxu0 0
    %499 = vmatpush1.bf16.xpose.msra.mxu0 0
    %500 = vmatprep.subr.bf16.mxu0 0
    %501 = vmatpush1.bf16.xpose.msra.mxu0 0
    %502 = vmatprep.subr.bf16.mxu0 0
    %503 = vmatpush1.bf16.xpose.msra.mxu0 0
    %504 = vmatprep.subr.bf16.mxu0 0
    %505 = vmatpush1.bf16.xpose.msra.mxu0 0
    %506 = vmatprep.subr.bf16.mxu0 0
    %507 = vmatpush1.bf16.xpose.msra.mxu0 0
    %508 = vmatprep.mubr.bf16.mxu0 0
    %509 = vmatmul.mubr.bf16.gmra.mrb[0].mxu0 %v471
    %v510 = vpop.f32.mrb[0].mxu0
    %v511 = vadd.f32 0.0, %v510
    %v512 = vpop.f32.mrb[0].mxu0
    %v513 = vpop.f32.mrb[0].mxu0
    %v514 = vpop.f32.mrb[0].mxu0
    %515 = vdwg.mxu0
    %517 = vrot.lane.b32.xlu0 %v308, 64
    %v518 = vpop.permute.xlu0 %517
    %v520 = vsel %vm218, %v308, 0
    %v523 = vsel %vm218, %v518, 0
    %525 = vmatprep.subr.bf16.mxu0 0
    %526 = vmatpush1.bf16.xpose.msra.mxu0 %v523
    %527 = vmatprep.subr.bf16.mxu0 0
    %528 = vmatpush1.bf16.xpose.msra.mxu0 0
    %529 = vmatprep.subr.bf16.mxu0 0
    %530 = vmatpush1.bf16.xpose.msra.mxu0 0
    %531 = vmatprep.subr.bf16.mxu0 0
    %532 = vmatpush1.bf16.xpose.msra.mxu0 0
    %533 = vmatprep.subr.bf16.mxu0 0
    %534 = vmatpush1.bf16.xpose.msra.mxu0 0
    %535 = vmatprep.subr.bf16.mxu0 0
    %536 = vmatpush1.bf16.xpose.msra.mxu0 0
    %537 = vmatprep.subr.bf16.mxu0 0
    %538 = vmatpush1.bf16.xpose.msra.mxu0 0
    %539 = vmatprep.subr.bf16.mxu0 0
    %540 = vmatpush1.bf16.xpose.msra.mxu0 0
    %541 = vmatprep.subr.bf16.mxu0 0
    %542 = vmatpush1.bf16.xpose.msra.mxu0 0
    %543 = vmatprep.subr.bf16.mxu0 0
    %544 = vmatpush1.bf16.xpose.msra.mxu0 0
    %545 = vmatprep.subr.bf16.mxu0 0
    %546 = vmatpush1.bf16.xpose.msra.mxu0 0
    %547 = vmatprep.subr.bf16.mxu0 0
    %548 = vmatpush1.bf16.xpose.msra.mxu0 0
    %549 = vmatprep.subr.bf16.mxu0 0
    %550 = vmatpush1.bf16.xpose.msra.mxu0 0
    %551 = vmatprep.subr.bf16.mxu0 0
    %552 = vmatpush1.bf16.xpose.msra.mxu0 0
    %553 = vmatprep.subr.bf16.mxu0 0
    %554 = vmatpush1.bf16.xpose.msra.mxu0 0
    %555 = vmatprep.subr.bf16.mxu0 0
    %556 = vmatpush1.bf16.xpose.msra.mxu0 0
    %557 = vmatprep.mubr.bf16.mxu0 0
    %558 = vmatmul.mubr.bf16.gmra.mrb[0].mxu0 %v520
    %v559 = vpop.f32.mrb[0].mxu0
    %v560 = vadd.f32 0.0, %v559
    %v561 = vpop.f32.mrb[0].mxu0
    %v562 = vpop.f32.mrb[0].mxu0
    %v563 = vpop.f32.mrb[0].mxu0
    %564 = vdwg.mxu0
    %566 = vrot.lane.b32.xlu0 %v309, 64
    %v567 = vpop.permute.xlu0 %566
    %v569 = vsel %vm218, %v309, 0
    %v572 = vsel %vm218, %v567, 0
    %574 = vmatprep.subr.bf16.mxu0 0
    %575 = vmatpush1.bf16.xpose.msra.mxu0 %v572
    %576 = vmatprep.subr.bf16.mxu0 0
    %577 = vmatpush1.bf16.xpose.msra.mxu0 0
    %578 = vmatprep.subr.bf16.mxu0 0
    %579 = vmatpush1.bf16.xpose.msra.mxu0 0
    %580 = vmatprep.subr.bf16.mxu0 0
    %581 = vmatpush1.bf16.xpose.msra.mxu0 0
    %582 = vmatprep.subr.bf16.mxu0 0
    %583 = vmatpush1.bf16.xpose.msra.mxu0 0
    %584 = vmatprep.subr.bf16.mxu0 0
    %585 = vmatpush1.bf16.xpose.msra.mxu0 0
    %586 = vmatprep.subr.bf16.mxu0 0
    %587 = vmatpush1.bf16.xpose.msra.mxu0 0
    %588 = vmatprep.subr.bf16.mxu0 0
    %589 = vmatpush1.bf16.xpose.msra.mxu0 0
    %590 = vmatprep.subr.bf16.mxu0 0
    %591 = vmatpush1.bf16.xpose.msra.mxu0 0
    %592 = vmatprep.subr.bf16.mxu0 0
    %593 = vmatpush1.bf16.xpose.msra.mxu0 0
    %594 = vmatprep.subr.bf16.mxu0 0
    %595 = vmatpush1.bf16.xpose.msra.mxu0 0
    %596 = vmatprep.subr.bf16.mxu0 0
    %597 = vmatpush1.bf16.xpose.msra.mxu0 0
    %598 = vmatprep.subr.bf16.mxu0 0
    %599 = vmatpush1.bf16.xpose.msra.mxu0 0
    %600 = vmatprep.subr.bf16.mxu0 0
    %601 = vmatpush1.bf16.xpose.msra.mxu0 0
    %602 = vmatprep.subr.bf16.mxu0 0
    %603 = vmatpush1.bf16.xpose.msra.mxu0 0
    %604 = vmatprep.subr.bf16.mxu0 0
    %605 = vmatpush1.bf16.xpose.msra.mxu0 0
    %606 = vmatprep.mubr.bf16.mxu0 0
    %607 = vmatmul.mubr.bf16.gmra.mrb[0].mxu0 %v569
    %v608 = vpop.f32.mrb[0].mxu0
    %v609 = vadd.f32 0.0, %v608
    %v610 = vpop.f32.mrb[0].mxu0
    %v611 = vpop.f32.mrb[0].mxu0
    %v612 = vpop.f32.mrb[0].mxu0
    %613 = vdwg.mxu0
    %615 = vrot.lane.b32.xlu0 %v310, 64
    %v616 = vpop.permute.xlu0 %615
    %v618 = vsel %vm218, %v310, 0
    %v621 = vsel %vm218, %v616, 0
    %623 = vmatprep.subr.bf16.mxu0 0
    %624 = vmatpush1.bf16.xpose.msra.mxu0 %v621
    %625 = vmatprep.subr.bf16.mxu0 0
    %626 = vmatpush1.bf16.xpose.msra.mxu0 0
    %627 = vmatprep.subr.bf16.mxu0 0
    %628 = vmatpush1.bf16.xpose.msra.mxu0 0
    %629 = vmatprep.subr.bf16.mxu0 0
    %630 = vmatpush1.bf16.xpose.msra.mxu0 0
    %631 = vmatprep.subr.bf16.mxu0 0
    %632 = vmatpush1.bf16.xpose.msra.mxu0 0
    %633 = vmatprep.subr.bf16.mxu0 0
    %634 = vmatpush1.bf16.xpose.msra.mxu0 0
    %635 = vmatprep.subr.bf16.mxu0 0
    %636 = vmatpush1.bf16.xpose.msra.mxu0 0
    %637 = vmatprep.subr.bf16.mxu0 0
    %638 = vmatpush1.bf16.xpose.msra.mxu0 0
    %639 = vmatprep.subr.bf16.mxu0 0
    %640 = vmatpush1.bf16.xpose.msra.mxu0 0
    %641 = vmatprep.subr.bf16.mxu0 0
    %642 = vmatpush1.bf16.xpose.msra.mxu0 0
    %643 = vmatprep.subr.bf16.mxu0 0
    %644 = vmatpush1.bf16.xpose.msra.mxu0 0
    %645 = vmatprep.subr.bf16.mxu0 0
    %646 = vmatpush1.bf16.xpose.msra.mxu0 0
    %647 = vmatprep.subr.bf16.mxu0 0
    %648 = vmatpush1.bf16.xpose.msra.mxu0 0
    %649 = vmatprep.subr.bf16.mxu0 0
    %650 = vmatpush1.bf16.xpose.msra.mxu0 0
    %651 = vmatprep.subr.bf16.mxu0 0
    %652 = vmatpush1.bf16.xpose.msra.mxu0 0
    %653 = vmatprep.subr.bf16.mxu0 0
    %654 = vmatpush1.bf16.xpose.msra.mxu0 0
    %655 = vmatprep.mubr.bf16.mxu0 0
    %656 = vmatmul.mubr.bf16.gmra.mrb[0].mxu0 %v618
    %v657 = vpop.f32.mrb[0].mxu0
    %v658 = vadd.f32 0.0, %v657
    %v659 = vpop.f32.mrb[0].mxu0
    %v660 = vpop.f32.mrb[0].mxu0
    %v661 = vpop.f32.mrb[0].mxu0
    %662 = vdwg.mxu0
    %664 = vrot.lane.b32.xlu0 %v311, 64
    %v665 = vpop.permute.xlu0 %664
    %v667 = vsel %vm218, %v311, 0
    %v670 = vsel %vm218, %v665, 0
    %672 = vmatprep.subr.bf16.mxu0 0
    %673 = vmatpush1.bf16.xpose.msra.mxu0 %v670
    %674 = vmatprep.subr.bf16.mxu0 0
    %675 = vmatpush1.bf16.xpose.msra.mxu0 0
    %676 = vmatprep.subr.bf16.mxu0 0
    %677 = vmatpush1.bf16.xpose.msra.mxu0 0
    %678 = vmatprep.subr.bf16.mxu0 0
    %679 = vmatpush1.bf16.xpose.msra.mxu0 0
    %680 = vmatprep.subr.bf16.mxu0 0
    %681 = vmatpush1.bf16.xpose.msra.mxu0 0
    %682 = vmatprep.subr.bf16.mxu0 0
    %683 = vmatpush1.bf16.xpose.msra.mxu0 0
    %684 = vmatprep.subr.bf16.mxu0 0
    %685 = vmatpush1.bf16.xpose.msra.mxu0 0
    %686 = vmatprep.subr.bf16.mxu0 0
    %687 = vmatpush1.bf16.xpose.msra.mxu0 0
    %688 = vmatprep.subr.bf16.mxu0 0
    %689 = vmatpush1.bf16.xpose.msra.mxu0 0
    %690 = vmatprep.subr.bf16.mxu0 0
    %691 = vmatpush1.bf16.xpose.msra.mxu0 0
    %692 = vmatprep.subr.bf16.mxu0 0
    %693 = vmatpush1.bf16.xpose.msra.mxu0 0
    %694 = vmatprep.subr.bf16.mxu0 0
    %695 = vmatpush1.bf16.xpose.msra.mxu0 0
    %696 = vmatprep.subr.bf16.mxu0 0
    %697 = vmatpush1.bf16.xpose.msra.mxu0 0
    %698 = vmatprep.subr.bf16.mxu0 0
    %699 = vmatpush1.bf16.xpose.msra.mxu0 0
    %700 = vmatprep.subr.bf16.mxu0 0
    %701 = vmatpush1.bf16.xpose.msra.mxu0 0
    %702 = vmatprep.subr.bf16.mxu0 0
    %703 = vmatpush1.bf16.xpose.msra.mxu0 0
    %704 = vmatprep.mubr.bf16.mxu0 0
    %705 = vmatmul.mubr.bf16.gmra.mrb[0].mxu0 %v667
    %v706 = vpop.f32.mrb[0].mxu0
    %v707 = vadd.f32 0.0, %v706
    %v708 = vpop.f32.mrb[0].mxu0
    %v709 = vpop.f32.mrb[0].mxu0
    %v710 = vpop.f32.mrb[0].mxu0
    %711 = vdwg.mxu0
    %v712 = vmul.f32 %v364, 0.2236068
    %v713 = vmul.f32 %v413, 0.2236068
    %v714 = vmul.f32 %v462, 0.2236068
    %v715 = vmul.f32 %v511, 0.2236068
    %v716 = vmul.f32 %v560, 0.2236068
    %v717 = vmul.f32 %v609, 0.2236068
    %v718 = vmul.f32 %v658, 0.2236068
    %v719 = vmul.f32 %v707, 0.2236068
    %v720 = vmul.f32 %v712, 1.442695
    %v721 = vpow.pop %v720
    %v722 = vmul.f32 %v713, 1.442695
    %v723 = vpow.pop %v722
    %v724 = vmul.f32 %v714, 1.442695
    %v725 = vpow.pop %v724
    %v726 = vmul.f32 %v715, 1.442695
    %v727 = vpow.pop %v726
    %v728 = vmul.f32 %v716, 1.442695
    %v729 = vpow.pop %v728
    %v730 = vmul.f32 %v717, 1.442695
    %v731 = vpow.pop %v730
    %v732 = vmul.f32 %v718, 1.442695
    %v733 = vpow.pop %v732
    %v734 = vmul.f32 %v719, 1.442695
    %v735 = vpow.pop %v734
    %v736 = vlaneseq
    %v737 = vshrl.u32 %v736, 7
    %v738 = vsub.s32 0, %v737
    %v739 = vrot.slane %v72, %v738
    %v740 = vlaneseq
    %v741 = vshrl.u32 %v740, 7
    %v742 = vsub.s32 0, %v741
    %v743 = vrot.slane %v86, %v742
    %v744 = vlaneseq
    %v745 = vshrl.u32 %v744, 7
    %v746 = vsub.s32 0, %v745
    %v747 = vrot.slane %v94, %v746
    %v748 = vlaneseq
    %v749 = vshrl.u32 %v748, 7
    %v750 = vsub.s32 0, %v749
    %v751 = vrot.slane %v96, %v750
    %v752 = vlaneseq
    %v753 = vshrl.u32 %v752, 7
    %v754 = vsub.s32 0, %v753
    %v755 = vrot.slane %v79, %v754
    %v756 = vlaneseq
    %v757 = vshrl.u32 %v756, 7
    %v758 = vsub.s32 0, %v757
    %v759 = vrot.slane %v93, %v758
    %v760 = vlaneseq
    %v761 = vshrl.u32 %v760, 7
    %v762 = vsub.s32 0, %v761
    %v763 = vrot.slane %v95, %v762
    %v764 = vlaneseq
    %v765 = vshrl.u32 %v764, 7
    %v766 = vsub.s32 0, %v765
    %v767 = vrot.slane %v97, %v766
    %v776 = vmul.f32 %v721, %v739
    %v777 = vmul.f32 %v723, %v743
    %v778 = vmul.f32 %v725, %v747
    %v779 = vmul.f32 %v727, %v751
    %v780 = vmul.f32 %v729, %v755
    %v781 = vmul.f32 %v731, %v759
    %v782 = vmul.f32 %v733, %v763
    %v783 = vmul.f32 %v735, %v767
    %vm784 = vcmask 64512
    %v785 = vsel %vm784, %v776, 0.0
    %786 = vadd.xlane.f32.xlu0 %v785
    %v787 = vpop.xlane.xlu0 %786
    %v788 = vsel %vm784, %v777, 0.0
    %789 = vadd.xlane.f32.xlu0 %v788
    %v790 = vpop.xlane.xlu0 %789
    %v791 = vsel %vm784, %v778, 0.0
    %792 = vadd.xlane.f32.xlu0 %v791
    %v793 = vpop.xlane.xlu0 %792
    %v794 = vsel %vm784, %v779, 0.0
    %795 = vadd.xlane.f32.xlu0 %v794
    %v796 = vpop.xlane.xlu0 %795
    %v797 = vsel %vm784, %v780, 0.0
    %798 = vadd.xlane.f32.xlu0 %v797
    %v799 = vpop.xlane.xlu0 %798
    %v800 = vsel %vm784, %v781, 0.0
    %801 = vadd.xlane.f32.xlu0 %v800
    %v802 = vpop.xlane.xlu0 %801
    %v803 = vsel %vm784, %v782, 0.0
    %804 = vadd.xlane.f32.xlu0 %v803
    %v805 = vpop.xlane.xlu0 %804
    %v806 = vsel %vm784, %v783, 0.0
    %807 = vadd.xlane.f32.xlu0 %v806
    %v808 = vpop.xlane.xlu0 %807
    %v809 = vadd.f32 %v787, 1e-08
    %v810 = vadd.f32 %v790, 1e-08
    %v811 = vadd.f32 %v793, 1e-08
    %v812 = vadd.f32 %v796, 1e-08
    %v813 = vadd.f32 %v799, 1e-08
    %v814 = vadd.f32 %v802, 1e-08
    %v815 = vadd.f32 %v805, 1e-08
    %v816 = vadd.f32 %v808, 1e-08
    %v817 = vrcp.pop %v809
    %v818 = vrcp.pop %v810
    %v819 = vrcp.pop %v811
    %v820 = vrcp.pop %v812
    %v821 = vrcp.pop %v813
    %v822 = vrcp.pop %v814
    %v823 = vrcp.pop %v815
    %v824 = vrcp.pop %v816
    %v825 = vmul.f32 %v776, %v817
    %v826 = vmul.f32 %v777, %v818
    %v827 = vmul.f32 %v778, %v819
    %v828 = vmul.f32 %v779, %v820
    %v829 = vmul.f32 %v780, %v821
    %v830 = vmul.f32 %v781, %v822
    %v831 = vmul.f32 %v782, %v823
    %v832 = vmul.f32 %v783, %v824
    %v833 = vpack.c.bf16 %v825, %v825
    %v834 = vpack.c.bf16 %v826, %v826
    %v835 = vpack.c.bf16 %v827, %v827
    %v836 = vpack.c.bf16 %v828, %v828
    %v837 = vpack.c.bf16 %v829, %v829
    %v838 = vpack.c.bf16 %v830, %v830
    %v839 = vpack.c.bf16 %v831, %v831
    %v840 = vpack.c.bf16 %v832, %v832
    %v842 = vsel %vm784, %v833, 0
    %vm844 = vcmask 1043456
    %v846 = vsel %vm844, %v312, 0
    %848 = vmatprep.subr.bf16.mxu0 0
    %849 = vmatpush1.bf16.msra.mxu0 %v846
    %850 = vmatprep.subr.bf16.mxu0 0
    %851 = vmatpush1.bf16.msra.mxu0 0
    %852 = vmatprep.subr.bf16.mxu0 0
    %853 = vmatpush1.bf16.msra.mxu0 0
    %854 = vmatprep.subr.bf16.mxu0 0
    %855 = vmatpush1.bf16.msra.mxu0 0
    %856 = vmatprep.subr.bf16.mxu0 0
    %857 = vmatpush1.bf16.msra.mxu0 0
    %858 = vmatprep.subr.bf16.mxu0 0
    %859 = vmatpush1.bf16.msra.mxu0 0
    %860 = vmatprep.subr.bf16.mxu0 0
    %861 = vmatpush1.bf16.msra.mxu0 0
    %862 = vmatprep.subr.bf16.mxu0 0
    %863 = vmatpush1.bf16.msra.mxu0 0
    %864 = vmatprep.subr.bf16.mxu0 0
    %865 = vmatpush1.bf16.msra.mxu0 0
    %866 = vmatprep.subr.bf16.mxu0 0
    %867 = vmatpush1.bf16.msra.mxu0 0
    %868 = vmatprep.subr.bf16.mxu0 0
    %869 = vmatpush1.bf16.msra.mxu0 0
    %870 = vmatprep.subr.bf16.mxu0 0
    %871 = vmatpush1.bf16.msra.mxu0 0
    %872 = vmatprep.subr.bf16.mxu0 0
    %873 = vmatpush1.bf16.msra.mxu0 0
    %874 = vmatprep.subr.bf16.mxu0 0
    %875 = vmatpush1.bf16.msra.mxu0 0
    %876 = vmatprep.subr.bf16.mxu0 0
    %877 = vmatpush1.bf16.msra.mxu0 0
    %878 = vmatprep.subr.bf16.mxu0 0
    %879 = vmatpush1.bf16.msra.mxu0 0
    %880 = vmatprep.mubr.bf16.mxu0 0
    %881 = vmatmul.mubr.bf16.gmra.mrb[0].mxu0 %v842
    %v882 = vpop.f32.mrb[0].mxu0
    %v883 = vadd.f32 0.0, %v882
    %v884 = vpop.f32.mrb[0].mxu0
    %v885 = vpop.f32.mrb[0].mxu0
    %v886 = vpop.f32.mrb[0].mxu0
    %887 = vdwg.mxu0
    %v889 = vsel %vm784, %v834, 0
    %v892 = vsel %vm844, %v313, 0
    %894 = vmatprep.subr.bf16.mxu0 0
    %895 = vmatpush1.bf16.msra.mxu0 %v892
    %896 = vmatprep.subr.bf16.mxu0 0
    %897 = vmatpush1.bf16.msra.mxu0 0
    %898 = vmatprep.subr.bf16.mxu0 0
    %899 = vmatpush1.bf16.msra.mxu0 0
    %900 = vmatprep.subr.bf16.mxu0 0
    %901 = vmatpush1.bf16.msra.mxu0 0
    %902 = vmatprep.subr.bf16.mxu0 0
    %903 = vmatpush1.bf16.msra.mxu0 0
    %904 = vmatprep.subr.bf16.mxu0 0
    %905 = vmatpush1.bf16.msra.mxu0 0
    %906 = vmatprep.subr.bf16.mxu0 0
    %907 = vmatpush1.bf16.msra.mxu0 0
    %908 = vmatprep.subr.bf16.mxu0 0
    %909 = vmatpush1.bf16.msra.mxu0 0
    %910 = vmatprep.subr.bf16.mxu0 0
    %911 = vmatpush1.bf16.msra.mxu0 0
    %912 = vmatprep.subr.bf16.mxu0 0
    %913 = vmatpush1.bf16.msra.mxu0 0
    %914 = vmatprep.subr.bf16.mxu0 0
    %915 = vmatpush1.bf16.msra.mxu0 0
    %916 = vmatprep.subr.bf16.mxu0 0
    %917 = vmatpush1.bf16.msra.mxu0 0
    %918 = vmatprep.subr.bf16.mxu0 0
    %919 = vmatpush1.bf16.msra.mxu0 0
    %920 = vmatprep.subr.bf16.mxu0 0
    %921 = vmatpush1.bf16.msra.mxu0 0
    %922 = vmatprep.subr.bf16.mxu0 0
    %923 = vmatpush1.bf16.msra.mxu0 0
    %924 = vmatprep.subr.bf16.mxu0 0
    %925 = vmatpush1.bf16.msra.mxu0 0
    %926 = vmatprep.mubr.bf16.mxu0 0
    %927 = vmatmul.mubr.bf16.gmra.mrb[0].mxu0 %v889
    %v928 = vpop.f32.mrb[0].mxu0
    %v929 = vadd.f32 0.0, %v928
    %v930 = vpop.f32.mrb[0].mxu0
    %v931 = vpop.f32.mrb[0].mxu0
    %v932 = vpop.f32.mrb[0].mxu0
    %933 = vdwg.mxu0
    %v935 = vsel %vm784, %v835, 0
    %v938 = vsel %vm844, %v314, 0
    %940 = vmatprep.subr.bf16.mxu0 0
    %941 = vmatpush1.bf16.msra.mxu0 %v938
    %942 = vmatprep.subr.bf16.mxu0 0
    %943 = vmatpush1.bf16.msra.mxu0 0
    %944 = vmatprep.subr.bf16.mxu0 0
    %945 = vmatpush1.bf16.msra.mxu0 0
    %946 = vmatprep.subr.bf16.mxu0 0
    %947 = vmatpush1.bf16.msra.mxu0 0
    %948 = vmatprep.subr.bf16.mxu0 0
    %949 = vmatpush1.bf16.msra.mxu0 0
    %950 = vmatprep.subr.bf16.mxu0 0
    %951 = vmatpush1.bf16.msra.mxu0 0
    %952 = vmatprep.subr.bf16.mxu0 0
    %953 = vmatpush1.bf16.msra.mxu0 0
    %954 = vmatprep.subr.bf16.mxu0 0
    %955 = vmatpush1.bf16.msra.mxu0 0
    %956 = vmatprep.subr.bf16.mxu0 0
    %957 = vmatpush1.bf16.msra.mxu0 0
    %958 = vmatprep.subr.bf16.mxu0 0
    %959 = vmatpush1.bf16.msra.mxu0 0
    %960 = vmatprep.subr.bf16.mxu0 0
    %961 = vmatpush1.bf16.msra.mxu0 0
    %962 = vmatprep.subr.bf16.mxu0 0
    %963 = vmatpush1.bf16.msra.mxu0 0
    %964 = vmatprep.subr.bf16.mxu0 0
    %965 = vmatpush1.bf16.msra.mxu0 0
    %966 = vmatprep.subr.bf16.mxu0 0
    %967 = vmatpush1.bf16.msra.mxu0 0
    %968 = vmatprep.subr.bf16.mxu0 0
    %969 = vmatpush1.bf16.msra.mxu0 0
    %970 = vmatprep.subr.bf16.mxu0 0
    %971 = vmatpush1.bf16.msra.mxu0 0
    %972 = vmatprep.mubr.bf16.mxu0 0
    %973 = vmatmul.mubr.bf16.gmra.mrb[0].mxu0 %v935
    %v974 = vpop.f32.mrb[0].mxu0
    %v975 = vadd.f32 0.0, %v974
    %v976 = vpop.f32.mrb[0].mxu0
    %v977 = vpop.f32.mrb[0].mxu0
    %v978 = vpop.f32.mrb[0].mxu0
    %979 = vdwg.mxu0
    %v981 = vsel %vm784, %v836, 0
    %v984 = vsel %vm844, %v315, 0
    %986 = vmatprep.subr.bf16.mxu0 0
    %987 = vmatpush1.bf16.msra.mxu0 %v984
    %988 = vmatprep.subr.bf16.mxu0 0
    %989 = vmatpush1.bf16.msra.mxu0 0
    %990 = vmatprep.subr.bf16.mxu0 0
    %991 = vmatpush1.bf16.msra.mxu0 0
    %992 = vmatprep.subr.bf16.mxu0 0
    %993 = vmatpush1.bf16.msra.mxu0 0
    %994 = vmatprep.subr.bf16.mxu0 0
    %995 = vmatpush1.bf16.msra.mxu0 0
    %996 = vmatprep.subr.bf16.mxu0 0
    %997 = vmatpush1.bf16.msra.mxu0 0
    %998 = vmatprep.subr.bf16.mxu0 0
    %999 = vmatpush1.bf16.msra.mxu0 0
    %1000 = vmatprep.subr.bf16.mxu0 0
    %1001 = vmatpush1.bf16.msra.mxu0 0
    %1002 = vmatprep.subr.bf16.mxu0 0
    %1003 = vmatpush1.bf16.msra.mxu0 0
    %1004 = vmatprep.subr.bf16.mxu0 0
    %1005 = vmatpush1.bf16.msra.mxu0 0
    %1006 = vmatprep.subr.bf16.mxu0 0
    %1007 = vmatpush1.bf16.msra.mxu0 0
    %1008 = vmatprep.subr.bf16.mxu0 0
    %1009 = vmatpush1.bf16.msra.mxu0 0
    %1010 = vmatprep.subr.bf16.mxu0 0
    %1011 = vmatpush1.bf16.msra.mxu0 0
    %1012 = vmatprep.subr.bf16.mxu0 0
    %1013 = vmatpush1.bf16.msra.mxu0 0
    %1014 = vmatprep.subr.bf16.mxu0 0
    %1015 = vmatpush1.bf16.msra.mxu0 0
    %1016 = vmatprep.subr.bf16.mxu0 0
    %1017 = vmatpush1.bf16.msra.mxu0 0
    %1018 = vmatprep.mubr.bf16.mxu0 0
    %1019 = vmatmul.mubr.bf16.gmra.mrb[0].mxu0 %v981
    %v1020 = vpop.f32.mrb[0].mxu0
    %v1021 = vadd.f32 0.0, %v1020
    %v1022 = vpop.f32.mrb[0].mxu0
    %v1023 = vpop.f32.mrb[0].mxu0
    %v1024 = vpop.f32.mrb[0].mxu0
    %1025 = vdwg.mxu0
    %v1027 = vsel %vm784, %v837, 0
    %v1030 = vsel %vm844, %v316, 0
    %1032 = vmatprep.subr.bf16.mxu0 0
    %1033 = vmatpush1.bf16.msra.mxu0 %v1030
    %1034 = vmatprep.subr.bf16.mxu0 0
    %1035 = vmatpush1.bf16.msra.mxu0 0
    %1036 = vmatprep.subr.bf16.mxu0 0
    %1037 = vmatpush1.bf16.msra.mxu0 0
    %1038 = vmatprep.subr.bf16.mxu0 0
    %1039 = vmatpush1.bf16.msra.mxu0 0
    %1040 = vmatprep.subr.bf16.mxu0 0
    %1041 = vmatpush1.bf16.msra.mxu0 0
    %1042 = vmatprep.subr.bf16.mxu0 0
    %1043 = vmatpush1.bf16.msra.mxu0 0
    %1044 = vmatprep.subr.bf16.mxu0 0
    %1045 = vmatpush1.bf16.msra.mxu0 0
    %1046 = vmatprep.subr.bf16.mxu0 0
    %1047 = vmatpush1.bf16.msra.mxu0 0
    %1048 = vmatprep.subr.bf16.mxu0 0
    %1049 = vmatpush1.bf16.msra.mxu0 0
    %1050 = vmatprep.subr.bf16.mxu0 0
    %1051 = vmatpush1.bf16.msra.mxu0 0
    %1052 = vmatprep.subr.bf16.mxu0 0
    %1053 = vmatpush1.bf16.msra.mxu0 0
    %1054 = vmatprep.subr.bf16.mxu0 0
    %1055 = vmatpush1.bf16.msra.mxu0 0
    %1056 = vmatprep.subr.bf16.mxu0 0
    %1057 = vmatpush1.bf16.msra.mxu0 0
    %1058 = vmatprep.subr.bf16.mxu0 0
    %1059 = vmatpush1.bf16.msra.mxu0 0
    %1060 = vmatprep.subr.bf16.mxu0 0
    %1061 = vmatpush1.bf16.msra.mxu0 0
    %1062 = vmatprep.subr.bf16.mxu0 0
    %1063 = vmatpush1.bf16.msra.mxu0 0
    %1064 = vmatprep.mubr.bf16.mxu0 0
    %1065 = vmatmul.mubr.bf16.gmra.mrb[0].mxu0 %v1027
    %v1066 = vpop.f32.mrb[0].mxu0
    %v1067 = vadd.f32 0.0, %v1066
    %v1068 = vpop.f32.mrb[0].mxu0
    %v1069 = vpop.f32.mrb[0].mxu0
    %v1070 = vpop.f32.mrb[0].mxu0
    %1071 = vdwg.mxu0
    %v1073 = vsel %vm784, %v838, 0
    %v1076 = vsel %vm844, %v317, 0
    %1078 = vmatprep.subr.bf16.mxu0 0
    %1079 = vmatpush1.bf16.msra.mxu0 %v1076
    %1080 = vmatprep.subr.bf16.mxu0 0
    %1081 = vmatpush1.bf16.msra.mxu0 0
    %1082 = vmatprep.subr.bf16.mxu0 0
    %1083 = vmatpush1.bf16.msra.mxu0 0
    %1084 = vmatprep.subr.bf16.mxu0 0
    %1085 = vmatpush1.bf16.msra.mxu0 0
    %1086 = vmatprep.subr.bf16.mxu0 0
    %1087 = vmatpush1.bf16.msra.mxu0 0
    %1088 = vmatprep.subr.bf16.mxu0 0
    %1089 = vmatpush1.bf16.msra.mxu0 0
    %1090 = vmatprep.subr.bf16.mxu0 0
    %1091 = vmatpush1.bf16.msra.mxu0 0
    %1092 = vmatprep.subr.bf16.mxu0 0
    %1093 = vmatpush1.bf16.msra.mxu0 0
    %1094 = vmatprep.subr.bf16.mxu0 0
    %1095 = vmatpush1.bf16.msra.mxu0 0
    %1096 = vmatprep.subr.bf16.mxu0 0
    %1097 = vmatpush1.bf16.msra.mxu0 0
    %1098 = vmatprep.subr.bf16.mxu0 0
    %1099 = vmatpush1.bf16.msra.mxu0 0
    %1100 = vmatprep.subr.bf16.mxu0 0
    %1101 = vmatpush1.bf16.msra.mxu0 0
    %1102 = vmatprep.subr.bf16.mxu0 0
    %1103 = vmatpush1.bf16.msra.mxu0 0
    %1104 = vmatprep.subr.bf16.mxu0 0
    %1105 = vmatpush1.bf16.msra.mxu0 0
    %1106 = vmatprep.subr.bf16.mxu0 0
    %1107 = vmatpush1.bf16.msra.mxu0 0
    %1108 = vmatprep.subr.bf16.mxu0 0
    %1109 = vmatpush1.bf16.msra.mxu0 0
    %1110 = vmatprep.mubr.bf16.mxu0 0
    %1111 = vmatmul.mubr.bf16.gmra.mrb[0].mxu0 %v1073
    %v1112 = vpop.f32.mrb[0].mxu0
    %v1113 = vadd.f32 0.0, %v1112
    %v1114 = vpop.f32.mrb[0].mxu0
    %v1115 = vpop.f32.mrb[0].mxu0
    %v1116 = vpop.f32.mrb[0].mxu0
    %1117 = vdwg.mxu0
    %v1119 = vsel %vm784, %v839, 0
    %v1122 = vsel %vm844, %v318, 0
    %1124 = vmatprep.subr.bf16.mxu0 0
    %1125 = vmatpush1.bf16.msra.mxu0 %v1122
    %1126 = vmatprep.subr.bf16.mxu0 0
    %1127 = vmatpush1.bf16.msra.mxu0 0
    %1128 = vmatprep.subr.bf16.mxu0 0
    %1129 = vmatpush1.bf16.msra.mxu0 0
    %1130 = vmatprep.subr.bf16.mxu0 0
    %1131 = vmatpush1.bf16.msra.mxu0 0
    %1132 = vmatprep.subr.bf16.mxu0 0
    %1133 = vmatpush1.bf16.msra.mxu0 0
    %1134 = vmatprep.subr.bf16.mxu0 0
    %1135 = vmatpush1.bf16.msra.mxu0 0
    %1136 = vmatprep.subr.bf16.mxu0 0
    %1137 = vmatpush1.bf16.msra.mxu0 0
    %1138 = vmatprep.subr.bf16.mxu0 0
    %1139 = vmatpush1.bf16.msra.mxu0 0
    %1140 = vmatprep.subr.bf16.mxu0 0
    %1141 = vmatpush1.bf16.msra.mxu0 0
    %1142 = vmatprep.subr.bf16.mxu0 0
    %1143 = vmatpush1.bf16.msra.mxu0 0
    %1144 = vmatprep.subr.bf16.mxu0 0
    %1145 = vmatpush1.bf16.msra.mxu0 0
    %1146 = vmatprep.subr.bf16.mxu0 0
    %1147 = vmatpush1.bf16.msra.mxu0 0
    %1148 = vmatprep.subr.bf16.mxu0 0
    %1149 = vmatpush1.bf16.msra.mxu0 0
    %1150 = vmatprep.subr.bf16.mxu0 0
    %1151 = vmatpush1.bf16.msra.mxu0 0
    %1152 = vmatprep.subr.bf16.mxu0 0
    %1153 = vmatpush1.bf16.msra.mxu0 0
    %1154 = vmatprep.subr.bf16.mxu0 0
    %1155 = vmatpush1.bf16.msra.mxu0 0
    %1156 = vmatprep.mubr.bf16.mxu0 0
    %1157 = vmatmul.mubr.bf16.gmra.mrb[0].mxu0 %v1119
    %v1158 = vpop.f32.mrb[0].mxu0
    %v1159 = vadd.f32 0.0, %v1158
    %v1160 = vpop.f32.mrb[0].mxu0
    %v1161 = vpop.f32.mrb[0].mxu0
    %v1162 = vpop.f32.mrb[0].mxu0
    %1163 = vdwg.mxu0
    %v1165 = vsel %vm784, %v840, 0
    %v1168 = vsel %vm844, %v319, 0
    %1170 = vmatprep.subr.bf16.mxu0 0
    %1171 = vmatpush1.bf16.msra.mxu0 %v1168
    %1172 = vmatprep.subr.bf16.mxu0 0
    %1173 = vmatpush1.bf16.msra.mxu0 0
    %1174 = vmatprep.subr.bf16.mxu0 0
    %1175 = vmatpush1.bf16.msra.mxu0 0
    %1176 = vmatprep.subr.bf16.mxu0 0
    %1177 = vmatpush1.bf16.msra.mxu0 0
    %1178 = vmatprep.subr.bf16.mxu0 0
    %1179 = vmatpush1.bf16.msra.mxu0 0
    %1180 = vmatprep.subr.bf16.mxu0 0
    %1181 = vmatpush1.bf16.msra.mxu0 0
    %1182 = vmatprep.subr.bf16.mxu0 0
    %1183 = vmatpush1.bf16.msra.mxu0 0
    %1184 = vmatprep.subr.bf16.mxu0 0
    %1185 = vmatpush1.bf16.msra.mxu0 0
    %1186 = vmatprep.subr.bf16.mxu0 0
    %1187 = vmatpush1.bf16.msra.mxu0 0
    %1188 = vmatprep.subr.bf16.mxu0 0
    %1189 = vmatpush1.bf16.msra.mxu0 0
    %1190 = vmatprep.subr.bf16.mxu0 0
    %1191 = vmatpush1.bf16.msra.mxu0 0
    %1192 = vmatprep.subr.bf16.mxu0 0
    %1193 = vmatpush1.bf16.msra.mxu0 0
    %1194 = vmatprep.subr.bf16.mxu0 0
    %1195 = vmatpush1.bf16.msra.mxu0 0
    %1196 = vmatprep.subr.bf16.mxu0 0
    %1197 = vmatpush1.bf16.msra.mxu0 0
    %1198 = vmatprep.subr.bf16.mxu0 0
    %1199 = vmatpush1.bf16.msra.mxu0 0
    %1200 = vmatprep.subr.bf16.mxu0 0
    %1201 = vmatpush1.bf16.msra.mxu0 0
    %1202 = vmatprep.mubr.bf16.mxu0 0
    %1203 = vmatmul.mubr.bf16.gmra.mrb[0].mxu0 %v1165
    %v1204 = vpop.f32.mrb[0].mxu0
    %v1205 = vadd.f32 0.0, %v1204
    %v1206 = vpop.f32.mrb[0].mxu0
    %v1207 = vpop.f32.mrb[0].mxu0
    %v1208 = vpop.f32.mrb[0].mxu0
    %1209 = vdwg.mxu0
    %v1210 = vpack.c.bf16 %v929, %v883
    %v1211 = vpack.c.bf16 %v1021, %v975
    %v1212 = vpack.c.bf16 %v1113, %v1067
    %v1213 = vpack.c.bf16 %v1205, %v1159
    %v1214 = vld [vmem:[%s4] sm:$0xf]
    %v1215 = vld [vmem:[%s4 + $0x4] sm:$0xf]
    %v1216 = vld [vmem:[%s4 + $0x8] sm:$0xf]
    %v1217 = vld [vmem:[%s4 + $0xc] sm:$0xf]
    %1218 = vrot.lane.b32.xlu0 %v304, 96
    %v1219 = vpop.permute.xlu0 %1218
    %1220 = vrot.lane.b32.xlu0 %v304, 32
    %v1221 = vpop.permute.xlu0 %1220
    %v1223 = vsel %vm218, %v1219, 0
    %v1226 = vsel %vm218, %v1221, 0
    %1228 = vmatprep.subr.bf16.mxu0 0
    %1229 = vmatpush1.bf16.xpose.msra.mxu0 %v1226
    %1230 = vmatprep.subr.bf16.mxu0 0
    %1231 = vmatpush1.bf16.xpose.msra.mxu0 0
    %1232 = vmatprep.subr.bf16.mxu0 0
    %1233 = vmatpush1.bf16.xpose.msra.mxu0 0
    %1234 = vmatprep.subr.bf16.mxu0 0
    %1235 = vmatpush1.bf16.xpose.msra.mxu0 0
    %1236 = vmatprep.subr.bf16.mxu0 0
    %1237 = vmatpush1.bf16.xpose.msra.mxu0 0
    %1238 = vmatprep.subr.bf16.mxu0 0
    %1239 = vmatpush1.bf16.xpose.msra.mxu0 0
    %1240 = vmatprep.subr.bf16.mxu0 0
    %1241 = vmatpush1.bf16.xpose.msra.mxu0 0
    %1242 = vmatprep.subr.bf16.mxu0 0
    %1243 = vmatpush1.bf16.xpose.msra.mxu0 0
    %1244 = vmatprep.subr.bf16.mxu0 0
    %1245 = vmatpush1.bf16.xpose.msra.mxu0 0
    %1246 = vmatprep.subr.bf16.mxu0 0
    %1247 = vmatpush1.bf16.xpose.msra.mxu0 0
    %1248 = vmatprep.subr.bf16.mxu0 0
    %1249 = vmatpush1.bf16.xpose.msra.mxu0 0
    %1250 = vmatprep.subr.bf16.mxu0 0
    %1251 = vmatpush1.bf16.xpose.msra.mxu0 0
    %1252 = vmatprep.subr.bf16.mxu0 0
    %1253 = vmatpush1.bf16.xpose.msra.mxu0 0
    %1254 = vmatprep.subr.bf16.mxu0 0
    %1255 = vmatpush1.bf16.xpose.msra.mxu0 0
    %1256 = vmatprep.subr.bf16.mxu0 0
    %1257 = vmatpush1.bf16.xpose.msra.mxu0 0
    %1258 = vmatprep.subr.bf16.mxu0 0
    %1259 = vmatpush1.bf16.xpose.msra.mxu0 0
    %1260 = vmatprep.mubr.bf16.mxu0 0
    %1261 = vmatmul.mubr.bf16.gmra.mrb[0].mxu0 %v1223
    %v1262 = vpop.f32.mrb[0].mxu0
    %v1263 = vadd.f32 0.0, %v1262
    %v1264 = vpop.f32.mrb[0].mxu0
    %v1265 = vpop.f32.mrb[0].mxu0
    %v1266 = vpop.f32.mrb[0].mxu0
    %1267 = vdwg.mxu0
    %1268 = vrot.lane.b32.xlu0 %v305, 96
    %v1269 = vpop.permute.xlu0 %1268
    %1270 = vrot.lane.b32.xlu0 %v305, 32
    %v1271 = vpop.permute.xlu0 %1270
    %v1273 = vsel %vm218, %v1269, 0
    %v1276 = vsel %vm218, %v1271, 0
    %1278 = vmatprep.subr.bf16.mxu0 0
    %1279 = vmatpush1.bf16.xpose.msra.mxu0 %v1276
    %1280 = vmatprep.subr.bf16.mxu0 0
    %1281 = vmatpush1.bf16.xpose.msra.mxu0 0
    %1282 = vmatprep.subr.bf16.mxu0 0
    %1283 = vmatpush1.bf16.xpose.msra.mxu0 0
    %1284 = vmatprep.subr.bf16.mxu0 0
    %1285 = vmatpush1.bf16.xpose.msra.mxu0 0
    %1286 = vmatprep.subr.bf16.mxu0 0
    %1287 = vmatpush1.bf16.xpose.msra.mxu0 0
    %1288 = vmatprep.subr.bf16.mxu0 0
    %1289 = vmatpush1.bf16.xpose.msra.mxu0 0
    %1290 = vmatprep.subr.bf16.mxu0 0
    %1291 = vmatpush1.bf16.xpose.msra.mxu0 0
    %1292 = vmatprep.subr.bf16.mxu0 0
    %1293 = vmatpush1.bf16.xpose.msra.mxu0 0
    %1294 = vmatprep.subr.bf16.mxu0 0
    %1295 = vmatpush1.bf16.xpose.msra.mxu0 0
    %1296 = vmatprep.subr.bf16.mxu0 0
    %1297 = vmatpush1.bf16.xpose.msra.mxu0 0
    %1298 = vmatprep.subr.bf16.mxu0 0
    %1299 = vmatpush1.bf16.xpose.msra.mxu0 0
    %1300 = vmatprep.subr.bf16.mxu0 0
    %1301 = vmatpush1.bf16.xpose.msra.mxu0 0
    %1302 = vmatprep.subr.bf16.mxu0 0
    %1303 = vmatpush1.bf16.xpose.msra.mxu0 0
    %1304 = vmatprep.subr.bf16.mxu0 0
    %1305 = vmatpush1.bf16.xpose.msra.mxu0 0
    %1306 = vmatprep.subr.bf16.mxu0 0
    %1307 = vmatpush1.bf16.xpose.msra.mxu0 0
    %1308 = vmatprep.subr.bf16.mxu0 0
    %1309 = vmatpush1.bf16.xpose.msra.mxu0 0
    %1310 = vmatprep.mubr.bf16.mxu0 0
    %1311 = vmatmul.mubr.bf16.gmra.mrb[0].mxu0 %v1273
    %v1312 = vpop.f32.mrb[0].mxu0
    %v1313 = vadd.f32 0.0, %v1312
    %v1314 = vpop.f32.mrb[0].mxu0
    %v1315 = vpop.f32.mrb[0].mxu0
    %v1316 = vpop.f32.mrb[0].mxu0
    %1317 = vdwg.mxu0
    %1318 = vrot.lane.b32.xlu0 %v306, 96
    %v1319 = vpop.permute.xlu0 %1318
    %1320 = vrot.lane.b32.xlu0 %v306, 32
    %v1321 = vpop.permute.xlu0 %1320
    %v1323 = vsel %vm218, %v1319, 0
    %v1326 = vsel %vm218, %v1321, 0
    %1328 = vmatprep.subr.bf16.mxu0 0
    %1329 = vmatpush1.bf16.xpose.msra.mxu0 %v1326
    %1330 = vmatprep.subr.bf16.mxu0 0
    %1331 = vmatpush1.bf16.xpose.msra.mxu0 0
    %1332 = vmatprep.subr.bf16.mxu0 0
    %1333 = vmatpush1.bf16.xpose.msra.mxu0 0
    %1334 = vmatprep.subr.bf16.mxu0 0
    %1335 = vmatpush1.bf16.xpose.msra.mxu0 0
    %1336 = vmatprep.subr.bf16.mxu0 0
    %1337 = vmatpush1.bf16.xpose.msra.mxu0 0
    %1338 = vmatprep.subr.bf16.mxu0 0
    %1339 = vmatpush1.bf16.xpose.msra.mxu0 0
    %1340 = vmatprep.subr.bf16.mxu0 0
    %1341 = vmatpush1.bf16.xpose.msra.mxu0 0
    %1342 = vmatprep.subr.bf16.mxu0 0
    %1343 = vmatpush1.bf16.xpose.msra.mxu0 0
    %1344 = vmatprep.subr.bf16.mxu0 0
    %1345 = vmatpush1.bf16.xpose.msra.mxu0 0
    %1346 = vmatprep.subr.bf16.mxu0 0
    %1347 = vmatpush1.bf16.xpose.msra.mxu0 0
    %1348 = vmatprep.subr.bf16.mxu0 0
    %1349 = vmatpush1.bf16.xpose.msra.mxu0 0
    %1350 = vmatprep.subr.bf16.mxu0 0
    %1351 = vmatpush1.bf16.xpose.msra.mxu0 0
    %1352 = vmatprep.subr.bf16.mxu0 0
    %1353 = vmatpush1.bf16.xpose.msra.mxu0 0
    %1354 = vmatprep.subr.bf16.mxu0 0
    %1355 = vmatpush1.bf16.xpose.msra.mxu0 0
    %1356 = vmatprep.subr.bf16.mxu0 0
    %1357 = vmatpush1.bf16.xpose.msra.mxu0 0
    %1358 = vmatprep.subr.bf16.mxu0 0
    %1359 = vmatpush1.bf16.xpose.msra.mxu0 0
    %1360 = vmatprep.mubr.bf16.mxu0 0
    %1361 = vmatmul.mubr.bf16.gmra.mrb[0].mxu0 %v1323
    %v1362 = vpop.f32.mrb[0].mxu0
    %v1363 = vadd.f32 0.0, %v1362
    %v1364 = vpop.f32.mrb[0].mxu0
    %v1365 = vpop.f32.mrb[0].mxu0
    %v1366 = vpop.f32.mrb[0].mxu0
    %1367 = vdwg.mxu0
    %1368 = vrot.lane.b32.xlu0 %v307, 96
    %v1369 = vpop.permute.xlu0 %1368
    %1370 = vrot.lane.b32.xlu0 %v307, 32
    %v1371 = vpop.permute.xlu0 %1370
    %v1373 = vsel %vm218, %v1369, 0
    %v1376 = vsel %vm218, %v1371, 0
    %1378 = vmatprep.subr.bf16.mxu0 0
    %1379 = vmatpush1.bf16.xpose.msra.mxu0 %v1376
    %1380 = vmatprep.subr.bf16.mxu0 0
    %1381 = vmatpush1.bf16.xpose.msra.mxu0 0
    %1382 = vmatprep.subr.bf16.mxu0 0
    %1383 = vmatpush1.bf16.xpose.msra.mxu0 0
    %1384 = vmatprep.subr.bf16.mxu0 0
    %1385 = vmatpush1.bf16.xpose.msra.mxu0 0
    %1386 = vmatprep.subr.bf16.mxu0 0
    %1387 = vmatpush1.bf16.xpose.msra.mxu0 0
    %1388 = vmatprep.subr.bf16.mxu0 0
    %1389 = vmatpush1.bf16.xpose.msra.mxu0 0
    %1390 = vmatprep.subr.bf16.mxu0 0
    %1391 = vmatpush1.bf16.xpose.msra.mxu0 0
    %1392 = vmatprep.subr.bf16.mxu0 0
    %1393 = vmatpush1.bf16.xpose.msra.mxu0 0
    %1394 = vmatprep.subr.bf16.mxu0 0
    %1395 = vmatpush1.bf16.xpose.msra.mxu0 0
    %1396 = vmatprep.subr.bf16.mxu0 0
    %1397 = vmatpush1.bf16.xpose.msra.mxu0 0
    %1398 = vmatprep.subr.bf16.mxu0 0
    %1399 = vmatpush1.bf16.xpose.msra.mxu0 0
    %1400 = vmatprep.subr.bf16.mxu0 0
    %1401 = vmatpush1.bf16.xpose.msra.mxu0 0
    %1402 = vmatprep.subr.bf16.mxu0 0
    %1403 = vmatpush1.bf16.xpose.msra.mxu0 0
    %1404 = vmatprep.subr.bf16.mxu0 0
    %1405 = vmatpush1.bf16.xpose.msra.mxu0 0
    %1406 = vmatprep.subr.bf16.mxu0 0
    %1407 = vmatpush1.bf16.xpose.msra.mxu0 0
    %1408 = vmatprep.subr.bf16.mxu0 0
    %1409 = vmatpush1.bf16.xpose.msra.mxu0 0
    %1410 = vmatprep.mubr.bf16.mxu0 0
    %1411 = vmatmul.mubr.bf16.gmra.mrb[0].mxu0 %v1373
    %v1412 = vpop.f32.mrb[0].mxu0
    %v1413 = vadd.f32 0.0, %v1412
    %v1414 = vpop.f32.mrb[0].mxu0
    %v1415 = vpop.f32.mrb[0].mxu0
    %v1416 = vpop.f32.mrb[0].mxu0
    %1417 = vdwg.mxu0
    %1418 = vrot.lane.b32.xlu0 %v308, 96
    %v1419 = vpop.permute.xlu0 %1418
    %1420 = vrot.lane.b32.xlu0 %v308, 32
    %v1421 = vpop.permute.xlu0 %1420
    %v1423 = vsel %vm218, %v1419, 0
    %v1426 = vsel %vm218, %v1421, 0
    %1428 = vmatprep.subr.bf16.mxu0 0
    %1429 = vmatpush1.bf16.xpose.msra.mxu0 %v1426
    %1430 = vmatprep.subr.bf16.mxu0 0
    %1431 = vmatpush1.bf16.xpose.msra.mxu0 0
    %1432 = vmatprep.subr.bf16.mxu0 0
    %1433 = vmatpush1.bf16.xpose.msra.mxu0 0
    %1434 = vmatprep.subr.bf16.mxu0 0
    %1435 = vmatpush1.bf16.xpose.msra.mxu0 0
    %1436 = vmatprep.subr.bf16.mxu0 0
    %1437 = vmatpush1.bf16.xpose.msra.mxu0 0
    %1438 = vmatprep.subr.bf16.mxu0 0
    %1439 = vmatpush1.bf16.xpose.msra.mxu0 0
    %1440 = vmatprep.subr.bf16.mxu0 0
    %1441 = vmatpush1.bf16.xpose.msra.mxu0 0
    %1442 = vmatprep.subr.bf16.mxu0 0
    %1443 = vmatpush1.bf16.xpose.msra.mxu0 0
    %1444 = vmatprep.subr.bf16.mxu0 0
    %1445 = vmatpush1.bf16.xpose.msra.mxu0 0
    %1446 = vmatprep.subr.bf16.mxu0 0
    %1447 = vmatpush1.bf16.xpose.msra.mxu0 0
    %1448 = vmatprep.subr.bf16.mxu0 0
    %1449 = vmatpush1.bf16.xpose.msra.mxu0 0
    %1450 = vmatprep.subr.bf16.mxu0 0
    %1451 = vmatpush1.bf16.xpose.msra.mxu0 0
    %1452 = vmatprep.subr.bf16.mxu0 0
    %1453 = vmatpush1.bf16.xpose.msra.mxu0 0
    %1454 = vmatprep.subr.bf16.mxu0 0
    %1455 = vmatpush1.bf16.xpose.msra.mxu0 0
    %1456 = vmatprep.subr.bf16.mxu0 0
    %1457 = vmatpush1.bf16.xpose.msra.mxu0 0
    %1458 = vmatprep.subr.bf16.mxu0 0
    %1459 = vmatpush1.bf16.xpose.msra.mxu0 0
    %1460 = vmatprep.mubr.bf16.mxu0 0
    %1461 = vmatmul.mubr.bf16.gmra.mrb[0].mxu0 %v1423
    %v1462 = vpop.f32.mrb[0].mxu0
    %v1463 = vadd.f32 0.0, %v1462
    %v1464 = vpop.f32.mrb[0].mxu0
    %v1465 = vpop.f32.mrb[0].mxu0
    %v1466 = vpop.f32.mrb[0].mxu0
    %1467 = vdwg.mxu0
    %1468 = vrot.lane.b32.xlu0 %v309, 96
    %v1469 = vpop.permute.xlu0 %1468
    %1470 = vrot.lane.b32.xlu0 %v309, 32
    %v1471 = vpop.permute.xlu0 %1470
    %v1473 = vsel %vm218, %v1469, 0
    %v1476 = vsel %vm218, %v1471, 0
    %1478 = vmatprep.subr.bf16.mxu0 0
    %1479 = vmatpush1.bf16.xpose.msra.mxu0 %v1476
    %1480 = vmatprep.subr.bf16.mxu0 0
    %1481 = vmatpush1.bf16.xpose.msra.mxu0 0
    %1482 = vmatprep.subr.bf16.mxu0 0
    %1483 = vmatpush1.bf16.xpose.msra.mxu0 0
    %1484 = vmatprep.subr.bf16.mxu0 0
    %1485 = vmatpush1.bf16.xpose.msra.mxu0 0
    %1486 = vmatprep.subr.bf16.mxu0 0
    %1487 = vmatpush1.bf16.xpose.msra.mxu0 0
    %1488 = vmatprep.subr.bf16.mxu0 0
    %1489 = vmatpush1.bf16.xpose.msra.mxu0 0
    %1490 = vmatprep.subr.bf16.mxu0 0
    %1491 = vmatpush1.bf16.xpose.msra.mxu0 0
    %1492 = vmatprep.subr.bf16.mxu0 0
    %1493 = vmatpush1.bf16.xpose.msra.mxu0 0
    %1494 = vmatprep.subr.bf16.mxu0 0
    %1495 = vmatpush1.bf16.xpose.msra.mxu0 0
    %1496 = vmatprep.subr.bf16.mxu0 0
    %1497 = vmatpush1.bf16.xpose.msra.mxu0 0
    %1498 = vmatprep.subr.bf16.mxu0 0
    %1499 = vmatpush1.bf16.xpose.msra.mxu0 0
    %1500 = vmatprep.subr.bf16.mxu0 0
    %1501 = vmatpush1.bf16.xpose.msra.mxu0 0
    %1502 = vmatprep.subr.bf16.mxu0 0
    %1503 = vmatpush1.bf16.xpose.msra.mxu0 0
    %1504 = vmatprep.subr.bf16.mxu0 0
    %1505 = vmatpush1.bf16.xpose.msra.mxu0 0
    %1506 = vmatprep.subr.bf16.mxu0 0
    %1507 = vmatpush1.bf16.xpose.msra.mxu0 0
    %1508 = vmatprep.subr.bf16.mxu0 0
    %1509 = vmatpush1.bf16.xpose.msra.mxu0 0
    %1510 = vmatprep.mubr.bf16.mxu0 0
    %1511 = vmatmul.mubr.bf16.gmra.mrb[0].mxu0 %v1473
    %v1512 = vpop.f32.mrb[0].mxu0
    %v1513 = vadd.f32 0.0, %v1512
    %v1514 = vpop.f32.mrb[0].mxu0
    %v1515 = vpop.f32.mrb[0].mxu0
    %v1516 = vpop.f32.mrb[0].mxu0
    %1517 = vdwg.mxu0
    %1518 = vrot.lane.b32.xlu0 %v310, 96
    %v1519 = vpop.permute.xlu0 %1518
    %1520 = vrot.lane.b32.xlu0 %v310, 32
    %v1521 = vpop.permute.xlu0 %1520
    %v1523 = vsel %vm218, %v1519, 0
    %v1526 = vsel %vm218, %v1521, 0
    %1528 = vmatprep.subr.bf16.mxu0 0
    %1529 = vmatpush1.bf16.xpose.msra.mxu0 %v1526
    %1530 = vmatprep.subr.bf16.mxu0 0
    %1531 = vmatpush1.bf16.xpose.msra.mxu0 0
    %1532 = vmatprep.subr.bf16.mxu0 0
    %1533 = vmatpush1.bf16.xpose.msra.mxu0 0
    %1534 = vmatprep.subr.bf16.mxu0 0
    %1535 = vmatpush1.bf16.xpose.msra.mxu0 0
    %1536 = vmatprep.subr.bf16.mxu0 0
    %1537 = vmatpush1.bf16.xpose.msra.mxu0 0
    %1538 = vmatprep.subr.bf16.mxu0 0
    %1539 = vmatpush1.bf16.xpose.msra.mxu0 0
    %1540 = vmatprep.subr.bf16.mxu0 0
    %1541 = vmatpush1.bf16.xpose.msra.mxu0 0
    %1542 = vmatprep.subr.bf16.mxu0 0
    %1543 = vmatpush1.bf16.xpose.msra.mxu0 0
    %1544 = vmatprep.subr.bf16.mxu0 0
    %1545 = vmatpush1.bf16.xpose.msra.mxu0 0
    %1546 = vmatprep.subr.bf16.mxu0 0
    %1547 = vmatpush1.bf16.xpose.msra.mxu0 0
    %1548 = vmatprep.subr.bf16.mxu0 0
    %1549 = vmatpush1.bf16.xpose.msra.mxu0 0
    %1550 = vmatprep.subr.bf16.mxu0 0
    %1551 = vmatpush1.bf16.xpose.msra.mxu0 0
    %1552 = vmatprep.subr.bf16.mxu0 0
    %1553 = vmatpush1.bf16.xpose.msra.mxu0 0
    %1554 = vmatprep.subr.bf16.mxu0 0
    %1555 = vmatpush1.bf16.xpose.msra.mxu0 0
    %1556 = vmatprep.subr.bf16.mxu0 0
    %1557 = vmatpush1.bf16.xpose.msra.mxu0 0
    %1558 = vmatprep.subr.bf16.mxu0 0
    %1559 = vmatpush1.bf16.xpose.msra.mxu0 0
    %1560 = vmatprep.mubr.bf16.mxu0 0
    %1561 = vmatmul.mubr.bf16.gmra.mrb[0].mxu0 %v1523
    %v1562 = vpop.f32.mrb[0].mxu0
    %v1563 = vadd.f32 0.0, %v1562
    %v1564 = vpop.f32.mrb[0].mxu0
    %v1565 = vpop.f32.mrb[0].mxu0
    %v1566 = vpop.f32.mrb[0].mxu0
    %1567 = vdwg.mxu0
    %1568 = vrot.lane.b32.xlu0 %v311, 96
    %v1569 = vpop.permute.xlu0 %1568
    %1570 = vrot.lane.b32.xlu0 %v311, 32
    %v1571 = vpop.permute.xlu0 %1570
    %v1573 = vsel %vm218, %v1569, 0
    %v1576 = vsel %vm218, %v1571, 0
    %1578 = vmatprep.subr.bf16.mxu0 0
    %1579 = vmatpush1.bf16.xpose.msra.mxu0 %v1576
    %1580 = vmatprep.subr.bf16.mxu0 0
    %1581 = vmatpush1.bf16.xpose.msra.mxu0 0
    %1582 = vmatprep.subr.bf16.mxu0 0
    %1583 = vmatpush1.bf16.xpose.msra.mxu0 0
    %1584 = vmatprep.subr.bf16.mxu0 0
    %1585 = vmatpush1.bf16.xpose.msra.mxu0 0
    %1586 = vmatprep.subr.bf16.mxu0 0
    %1587 = vmatpush1.bf16.xpose.msra.mxu0 0
    %1588 = vmatprep.subr.bf16.mxu0 0
    %1589 = vmatpush1.bf16.xpose.msra.mxu0 0
    %1590 = vmatprep.subr.bf16.mxu0 0
    %1591 = vmatpush1.bf16.xpose.msra.mxu0 0
    %1592 = vmatprep.subr.bf16.mxu0 0
    %1593 = vmatpush1.bf16.xpose.msra.mxu0 0
    %1594 = vmatprep.subr.bf16.mxu0 0
    %1595 = vmatpush1.bf16.xpose.msra.mxu0 0
    %1596 = vmatprep.subr.bf16.mxu0 0
    %1597 = vmatpush1.bf16.xpose.msra.mxu0 0
    %1598 = vmatprep.subr.bf16.mxu0 0
    %1599 = vmatpush1.bf16.xpose.msra.mxu0 0
    %1600 = vmatprep.subr.bf16.mxu0 0
    %1601 = vmatpush1.bf16.xpose.msra.mxu0 0
    %1602 = vmatprep.subr.bf16.mxu0 0
    %1603 = vmatpush1.bf16.xpose.msra.mxu0 0
    %1604 = vmatprep.subr.bf16.mxu0 0
    %1605 = vmatpush1.bf16.xpose.msra.mxu0 0
    %1606 = vmatprep.subr.bf16.mxu0 0
    %1607 = vmatpush1.bf16.xpose.msra.mxu0 0
    %1608 = vmatprep.subr.bf16.mxu0 0
    %1609 = vmatpush1.bf16.xpose.msra.mxu0 0
    %1610 = vmatprep.mubr.bf16.mxu0 0
    %1611 = vmatmul.mubr.bf16.gmra.mrb[0].mxu0 %v1573
    %v1612 = vpop.f32.mrb[0].mxu0
    %v1613 = vadd.f32 0.0, %v1612
    %v1614 = vpop.f32.mrb[0].mxu0
    %v1615 = vpop.f32.mrb[0].mxu0
    %v1616 = vpop.f32.mrb[0].mxu0
    %1617 = vdwg.mxu0
    %v1618 = vmul.f32 %v1263, 0.2236068
    %v1619 = vmul.f32 %v1313, 0.2236068
    %v1620 = vmul.f32 %v1363, 0.2236068
    %v1621 = vmul.f32 %v1413, 0.2236068
    %v1622 = vmul.f32 %v1463, 0.2236068
    %v1623 = vmul.f32 %v1513, 0.2236068
    %v1624 = vmul.f32 %v1563, 0.2236068
    %v1625 = vmul.f32 %v1613, 0.2236068
    %v1626 = vmul.f32 %v1618, 1.442695
    %v1627 = vpow.pop %v1626
    %v1628 = vmul.f32 %v1619, 1.442695
    %v1629 = vpow.pop %v1628
    %v1630 = vmul.f32 %v1620, 1.442695
    %v1631 = vpow.pop %v1630
    %v1632 = vmul.f32 %v1621, 1.442695
    %v1633 = vpow.pop %v1632
    %v1634 = vmul.f32 %v1622, 1.442695
    %v1635 = vpow.pop %v1634
    %v1636 = vmul.f32 %v1623, 1.442695
    %v1637 = vpow.pop %v1636
    %v1638 = vmul.f32 %v1624, 1.442695
    %v1639 = vpow.pop %v1638
    %v1640 = vmul.f32 %v1625, 1.442695
    %v1641 = vpow.pop %v1640
    %v1642 = vmul.f32 %v1627, %v739
    %v1643 = vmul.f32 %v1629, %v743
    %v1644 = vmul.f32 %v1631, %v747
    %v1645 = vmul.f32 %v1633, %v751
    %v1646 = vmul.f32 %v1635, %v755
    %v1647 = vmul.f32 %v1637, %v759
    %v1648 = vmul.f32 %v1639, %v763
    %v1649 = vmul.f32 %v1641, %v767
    %v1650 = vsel %vm784, %v1642, 0.0
    %1651 = vadd.xlane.f32.xlu0 %v1650
    %v1652 = vpop.xlane.xlu0 %1651
    %v1653 = vsel %vm784, %v1643, 0.0
    %1654 = vadd.xlane.f32.xlu0 %v1653
    %v1655 = vpop.xlane.xlu0 %1654
    %v1656 = vsel %vm784, %v1644, 0.0
    %1657 = vadd.xlane.f32.xlu0 %v1656
    %v1658 = vpop.xlane.xlu0 %1657
    %v1659 = vsel %vm784, %v1645, 0.0
    %1660 = vadd.xlane.f32.xlu0 %v1659
    %v1661 = vpop.xlane.xlu0 %1660
    %v1662 = vsel %vm784, %v1646, 0.0
    %1663 = vadd.xlane.f32.xlu0 %v1662
    %v1664 = vpop.xlane.xlu0 %1663
    %v1665 = vsel %vm784, %v1647, 0.0
    %1666 = vadd.xlane.f32.xlu0 %v1665
    %v1667 = vpop.xlane.xlu0 %1666
    %v1668 = vsel %vm784, %v1648, 0.0
    %1669 = vadd.xlane.f32.xlu0 %v1668
    %v1670 = vpop.xlane.xlu0 %1669
    %v1671 = vsel %vm784, %v1649, 0.0
    %1672 = vadd.xlane.f32.xlu0 %v1671
    %v1673 = vpop.xlane.xlu0 %1672
    %v1674 = vadd.f32 %v1652, 1e-08
    %v1675 = vadd.f32 %v1655, 1e-08
    %v1676 = vadd.f32 %v1658, 1e-08
    %v1677 = vadd.f32 %v1661, 1e-08
    %v1678 = vadd.f32 %v1664, 1e-08
    %v1679 = vadd.f32 %v1667, 1e-08
    %v1680 = vadd.f32 %v1670, 1e-08
    %v1681 = vadd.f32 %v1673, 1e-08
    %v1682 = vrcp.pop %v1674
    %v1683 = vrcp.pop %v1675
    %v1684 = vrcp.pop %v1676
    %v1685 = vrcp.pop %v1677
    %v1686 = vrcp.pop %v1678
    %v1687 = vrcp.pop %v1679
    %v1688 = vrcp.pop %v1680
    %v1689 = vrcp.pop %v1681
    %v1690 = vmul.f32 %v1642, %v1682
    %v1691 = vmul.f32 %v1643, %v1683
    %v1692 = vmul.f32 %v1644, %v1684
    %v1693 = vmul.f32 %v1645, %v1685
    %v1694 = vmul.f32 %v1646, %v1686
    %v1695 = vmul.f32 %v1647, %v1687
    %v1696 = vmul.f32 %v1648, %v1688
    %v1697 = vmul.f32 %v1649, %v1689
    %v1698 = vpack.c.bf16 %v1690, %v1690
    %v1699 = vpack.c.bf16 %v1691, %v1691
    %v1700 = vpack.c.bf16 %v1692, %v1692
    %v1701 = vpack.c.bf16 %v1693, %v1693
    %v1702 = vpack.c.bf16 %v1694, %v1694
    %v1703 = vpack.c.bf16 %v1695, %v1695
    %v1704 = vpack.c.bf16 %v1696, %v1696
    %v1705 = vpack.c.bf16 %v1697, %v1697
    %1707 = vrot.lane.b32.xlu0 %v312, 96
    %v1708 = vpop.permute.xlu0 %1707
    %v1710 = vsel %vm784, %v1698, 0
    %v1713 = vsel %vm844, %v1708, 0
    %1715 = vmatprep.subr.bf16.mxu0 0
    %1716 = vmatpush1.bf16.msra.mxu0 %v1713
    %1717 = vmatprep.subr.bf16.mxu0 0
    %1718 = vmatpush1.bf16.msra.mxu0 0
    %1719 = vmatprep.subr.bf16.mxu0 0
    %1720 = vmatpush1.bf16.msra.mxu0 0
    %1721 = vmatprep.subr.bf16.mxu0 0
    %1722 = vmatpush1.bf16.msra.mxu0 0
    %1723 = vmatprep.subr.bf16.mxu0 0
    %1724 = vmatpush1.bf16.msra.mxu0 0
    %1725 = vmatprep.subr.bf16.mxu0 0
    %1726 = vmatpush1.bf16.msra.mxu0 0
    %1727 = vmatprep.subr.bf16.mxu0 0
    %1728 = vmatpush1.bf16.msra.mxu0 0
    %1729 = vmatprep.subr.bf16.mxu0 0
    %1730 = vmatpush1.bf16.msra.mxu0 0
    %1731 = vmatprep.subr.bf16.mxu0 0
    %1732 = vmatpush1.bf16.msra.mxu0 0
    %1733 = vmatprep.subr.bf16.mxu0 0
    %1734 = vmatpush1.bf16.msra.mxu0 0
    %1735 = vmatprep.subr.bf16.mxu0 0
    %1736 = vmatpush1.bf16.msra.mxu0 0
    %1737 = vmatprep.subr.bf16.mxu0 0
    %1738 = vmatpush1.bf16.msra.mxu0 0
    %1739 = vmatprep.subr.bf16.mxu0 0
    %1740 = vmatpush1.bf16.msra.mxu0 0
    %1741 = vmatprep.subr.bf16.mxu0 0
    %1742 = vmatpush1.bf16.msra.mxu0 0
    %1743 = vmatprep.subr.bf16.mxu0 0
    %1744 = vmatpush1.bf16.msra.mxu0 0
    %1745 = vmatprep.subr.bf16.mxu0 0
    %1746 = vmatpush1.bf16.msra.mxu0 0
    %1747 = vmatprep.mubr.bf16.mxu0 0
    %1748 = vmatmul.mubr.bf16.gmra.mrb[0].mxu0 %v1710
    %v1749 = vpop.f32.mrb[0].mxu0
    %v1750 = vadd.f32 0.0, %v1749
    %v1751 = vpop.f32.mrb[0].mxu0
    %v1752 = vpop.f32.mrb[0].mxu0
    %v1753 = vpop.f32.mrb[0].mxu0
    %1754 = vdwg.mxu0
    %1756 = vrot.lane.b32.xlu0 %v313, 96
    %v1757 = vpop.permute.xlu0 %1756
    %v1759 = vsel %vm784, %v1699, 0
    %v1762 = vsel %vm844, %v1757, 0
    %1764 = vmatprep.subr.bf16.mxu0 0
    %1765 = vmatpush1.bf16.msra.mxu0 %v1762
    %1766 = vmatprep.subr.bf16.mxu0 0
    %1767 = vmatpush1.bf16.msra.mxu0 0
    %1768 = vmatprep.subr.bf16.mxu0 0
    %1769 = vmatpush1.bf16.msra.mxu0 0
    %1770 = vmatprep.subr.bf16.mxu0 0
    %1771 = vmatpush1.bf16.msra.mxu0 0
    %1772 = vmatprep.subr.bf16.mxu0 0
    %1773 = vmatpush1.bf16.msra.mxu0 0
    %1774 = vmatprep.subr.bf16.mxu0 0
    %1775 = vmatpush1.bf16.msra.mxu0 0
    %1776 = vmatprep.subr.bf16.mxu0 0
    %1777 = vmatpush1.bf16.msra.mxu0 0
    %1778 = vmatprep.subr.bf16.mxu0 0
    %1779 = vmatpush1.bf16.msra.mxu0 0
    %1780 = vmatprep.subr.bf16.mxu0 0
    %1781 = vmatpush1.bf16.msra.mxu0 0
    %1782 = vmatprep.subr.bf16.mxu0 0
    %1783 = vmatpush1.bf16.msra.mxu0 0
    %1784 = vmatprep.subr.bf16.mxu0 0
    %1785 = vmatpush1.bf16.msra.mxu0 0
    %1786 = vmatprep.subr.bf16.mxu0 0
    %1787 = vmatpush1.bf16.msra.mxu0 0
    %1788 = vmatprep.subr.bf16.mxu0 0
    %1789 = vmatpush1.bf16.msra.mxu0 0
    %1790 = vmatprep.subr.bf16.mxu0 0
    %1791 = vmatpush1.bf16.msra.mxu0 0
    %1792 = vmatprep.subr.bf16.mxu0 0
    %1793 = vmatpush1.bf16.msra.mxu0 0
    %1794 = vmatprep.subr.bf16.mxu0 0
    %1795 = vmatpush1.bf16.msra.mxu0 0
    %1796 = vmatprep.mubr.bf16.mxu0 0
    %1797 = vmatmul.mubr.bf16.gmra.mrb[0].mxu0 %v1759
    %v1798 = vpop.f32.mrb[0].mxu0
    %v1799 = vadd.f32 0.0, %v1798
    %v1800 = vpop.f32.mrb[0].mxu0
    %v1801 = vpop.f32.mrb[0].mxu0
    %v1802 = vpop.f32.mrb[0].mxu0
    %1803 = vdwg.mxu0
    %1805 = vrot.lane.b32.xlu0 %v314, 96
    %v1806 = vpop.permute.xlu0 %1805
    %v1808 = vsel %vm784, %v1700, 0
    %v1811 = vsel %vm844, %v1806, 0
    %1813 = vmatprep.subr.bf16.mxu0 0
    %1814 = vmatpush1.bf16.msra.mxu0 %v1811
    %1815 = vmatprep.subr.bf16.mxu0 0
    %1816 = vmatpush1.bf16.msra.mxu0 0
    %1817 = vmatprep.subr.bf16.mxu0 0
    %1818 = vmatpush1.bf16.msra.mxu0 0
    %1819 = vmatprep.subr.bf16.mxu0 0
    %1820 = vmatpush1.bf16.msra.mxu0 0
    %1821 = vmatprep.subr.bf16.mxu0 0
    %1822 = vmatpush1.bf16.msra.mxu0 0
    %1823 = vmatprep.subr.bf16.mxu0 0
    %1824 = vmatpush1.bf16.msra.mxu0 0
    %1825 = vmatprep.subr.bf16.mxu0 0
    %1826 = vmatpush1.bf16.msra.mxu0 0
    %1827 = vmatprep.subr.bf16.mxu0 0
    %1828 = vmatpush1.bf16.msra.mxu0 0
    %1829 = vmatprep.subr.bf16.mxu0 0
    %1830 = vmatpush1.bf16.msra.mxu0 0
    %1831 = vmatprep.subr.bf16.mxu0 0
    %1832 = vmatpush1.bf16.msra.mxu0 0
    %1833 = vmatprep.subr.bf16.mxu0 0
    %1834 = vmatpush1.bf16.msra.mxu0 0
    %1835 = vmatprep.subr.bf16.mxu0 0
    %1836 = vmatpush1.bf16.msra.mxu0 0
    %1837 = vmatprep.subr.bf16.mxu0 0
    %1838 = vmatpush1.bf16.msra.mxu0 0
    %1839 = vmatprep.subr.bf16.mxu0 0
    %1840 = vmatpush1.bf16.msra.mxu0 0
    %1841 = vmatprep.subr.bf16.mxu0 0
    %1842 = vmatpush1.bf16.msra.mxu0 0
    %1843 = vmatprep.subr.bf16.mxu0 0
    %1844 = vmatpush1.bf16.msra.mxu0 0
    %1845 = vmatprep.mubr.bf16.mxu0 0
    %1846 = vmatmul.mubr.bf16.gmra.mrb[0].mxu0 %v1808
    %v1847 = vpop.f32.mrb[0].mxu0
    %v1848 = vadd.f32 0.0, %v1847
    %v1849 = vpop.f32.mrb[0].mxu0
    %v1850 = vpop.f32.mrb[0].mxu0
    %v1851 = vpop.f32.mrb[0].mxu0
    %1852 = vdwg.mxu0
    %1854 = vrot.lane.b32.xlu0 %v315, 96
    %v1855 = vpop.permute.xlu0 %1854
    %v1857 = vsel %vm784, %v1701, 0
    %v1860 = vsel %vm844, %v1855, 0
    %1862 = vmatprep.subr.bf16.mxu0 0
    %1863 = vmatpush1.bf16.msra.mxu0 %v1860
    %1864 = vmatprep.subr.bf16.mxu0 0
    %1865 = vmatpush1.bf16.msra.mxu0 0
    %1866 = vmatprep.subr.bf16.mxu0 0
    %1867 = vmatpush1.bf16.msra.mxu0 0
    %1868 = vmatprep.subr.bf16.mxu0 0
    %1869 = vmatpush1.bf16.msra.mxu0 0
    %1870 = vmatprep.subr.bf16.mxu0 0
    %1871 = vmatpush1.bf16.msra.mxu0 0
    %1872 = vmatprep.subr.bf16.mxu0 0
    %1873 = vmatpush1.bf16.msra.mxu0 0
    %1874 = vmatprep.subr.bf16.mxu0 0
    %1875 = vmatpush1.bf16.msra.mxu0 0
    %1876 = vmatprep.subr.bf16.mxu0 0
    %1877 = vmatpush1.bf16.msra.mxu0 0
    %1878 = vmatprep.subr.bf16.mxu0 0
    %1879 = vmatpush1.bf16.msra.mxu0 0
    %1880 = vmatprep.subr.bf16.mxu0 0
    %1881 = vmatpush1.bf16.msra.mxu0 0
    %1882 = vmatprep.subr.bf16.mxu0 0
    %1883 = vmatpush1.bf16.msra.mxu0 0
    %1884 = vmatprep.subr.bf16.mxu0 0
    %1885 = vmatpush1.bf16.msra.mxu0 0
    %1886 = vmatprep.subr.bf16.mxu0 0
    %1887 = vmatpush1.bf16.msra.mxu0 0
    %1888 = vmatprep.subr.bf16.mxu0 0
    %1889 = vmatpush1.bf16.msra.mxu0 0
    %1890 = vmatprep.subr.bf16.mxu0 0
    %1891 = vmatpush1.bf16.msra.mxu0 0
    %1892 = vmatprep.subr.bf16.mxu0 0
    %1893 = vmatpush1.bf16.msra.mxu0 0
    %1894 = vmatprep.mubr.bf16.mxu0 0
    %1895 = vmatmul.mubr.bf16.gmra.mrb[0].mxu0 %v1857
    %v1896 = vpop.f32.mrb[0].mxu0
    %v1897 = vadd.f32 0.0, %v1896
    %v1898 = vpop.f32.mrb[0].mxu0
    %v1899 = vpop.f32.mrb[0].mxu0
    %v1900 = vpop.f32.mrb[0].mxu0
    %1901 = vdwg.mxu0
    %1903 = vrot.lane.b32.xlu0 %v316, 96
    %v1904 = vpop.permute.xlu0 %1903
    %v1906 = vsel %vm784, %v1702, 0
    %v1909 = vsel %vm844, %v1904, 0
    %1911 = vmatprep.subr.bf16.mxu0 0
    %1912 = vmatpush1.bf16.msra.mxu0 %v1909
    %1913 = vmatprep.subr.bf16.mxu0 0
    %1914 = vmatpush1.bf16.msra.mxu0 0
    %1915 = vmatprep.subr.bf16.mxu0 0
    %1916 = vmatpush1.bf16.msra.mxu0 0
    %1917 = vmatprep.subr.bf16.mxu0 0
    %1918 = vmatpush1.bf16.msra.mxu0 0
    %1919 = vmatprep.subr.bf16.mxu0 0
    %1920 = vmatpush1.bf16.msra.mxu0 0
    %1921 = vmatprep.subr.bf16.mxu0 0
    %1922 = vmatpush1.bf16.msra.mxu0 0
    %1923 = vmatprep.subr.bf16.mxu0 0
    %1924 = vmatpush1.bf16.msra.mxu0 0
    %1925 = vmatprep.subr.bf16.mxu0 0
    %1926 = vmatpush1.bf16.msra.mxu0 0
    %1927 = vmatprep.subr.bf16.mxu0 0
    %1928 = vmatpush1.bf16.msra.mxu0 0
    %1929 = vmatprep.subr.bf16.mxu0 0
    %1930 = vmatpush1.bf16.msra.mxu0 0
    %1931 = vmatprep.subr.bf16.mxu0 0
    %1932 = vmatpush1.bf16.msra.mxu0 0
    %1933 = vmatprep.subr.bf16.mxu0 0
    %1934 = vmatpush1.bf16.msra.mxu0 0
    %1935 = vmatprep.subr.bf16.mxu0 0
    %1936 = vmatpush1.bf16.msra.mxu0 0
    %1937 = vmatprep.subr.bf16.mxu0 0
    %1938 = vmatpush1.bf16.msra.mxu0 0
    %1939 = vmatprep.subr.bf16.mxu0 0
    %1940 = vmatpush1.bf16.msra.mxu0 0
    %1941 = vmatprep.subr.bf16.mxu0 0
    %1942 = vmatpush1.bf16.msra.mxu0 0
    %1943 = vmatprep.mubr.bf16.mxu0 0
    %1944 = vmatmul.mubr.bf16.gmra.mrb[0].mxu0 %v1906
    %v1945 = vpop.f32.mrb[0].mxu0
    %v1946 = vadd.f32 0.0, %v1945
    %v1947 = vpop.f32.mrb[0].mxu0
    %v1948 = vpop.f32.mrb[0].mxu0
    %v1949 = vpop.f32.mrb[0].mxu0
    %1950 = vdwg.mxu0
    %1952 = vrot.lane.b32.xlu0 %v317, 96
    %v1953 = vpop.permute.xlu0 %1952
    %v1955 = vsel %vm784, %v1703, 0
    %v1958 = vsel %vm844, %v1953, 0
    %1960 = vmatprep.subr.bf16.mxu0 0
    %1961 = vmatpush1.bf16.msra.mxu0 %v1958
    %1962 = vmatprep.subr.bf16.mxu0 0
    %1963 = vmatpush1.bf16.msra.mxu0 0
    %1964 = vmatprep.subr.bf16.mxu0 0
    %1965 = vmatpush1.bf16.msra.mxu0 0
    %1966 = vmatprep.subr.bf16.mxu0 0
    %1967 = vmatpush1.bf16.msra.mxu0 0
    %1968 = vmatprep.subr.bf16.mxu0 0
    %1969 = vmatpush1.bf16.msra.mxu0 0
    %1970 = vmatprep.subr.bf16.mxu0 0
    %1971 = vmatpush1.bf16.msra.mxu0 0
    %1972 = vmatprep.subr.bf16.mxu0 0
    %1973 = vmatpush1.bf16.msra.mxu0 0
    %1974 = vmatprep.subr.bf16.mxu0 0
    %1975 = vmatpush1.bf16.msra.mxu0 0
    %1976 = vmatprep.subr.bf16.mxu0 0
    %1977 = vmatpush1.bf16.msra.mxu0 0
    %1978 = vmatprep.subr.bf16.mxu0 0
    %1979 = vmatpush1.bf16.msra.mxu0 0
    %1980 = vmatprep.subr.bf16.mxu0 0
    %1981 = vmatpush1.bf16.msra.mxu0 0
    %1982 = vmatprep.subr.bf16.mxu0 0
    %1983 = vmatpush1.bf16.msra.mxu0 0
    %1984 = vmatprep.subr.bf16.mxu0 0
    %1985 = vmatpush1.bf16.msra.mxu0 0
    %1986 = vmatprep.subr.bf16.mxu0 0
    %1987 = vmatpush1.bf16.msra.mxu0 0
    %1988 = vmatprep.subr.bf16.mxu0 0
    %1989 = vmatpush1.bf16.msra.mxu0 0
    %1990 = vmatprep.subr.bf16.mxu0 0
    %1991 = vmatpush1.bf16.msra.mxu0 0
    %1992 = vmatprep.mubr.bf16.mxu0 0
    %1993 = vmatmul.mubr.bf16.gmra.mrb[0].mxu0 %v1955
    %v1994 = vpop.f32.mrb[0].mxu0
    %v1995 = vadd.f32 0.0, %v1994
    %v1996 = vpop.f32.mrb[0].mxu0
    %v1997 = vpop.f32.mrb[0].mxu0
    %v1998 = vpop.f32.mrb[0].mxu0
    %1999 = vdwg.mxu0
    %2001 = vrot.lane.b32.xlu0 %v318, 96
    %v2002 = vpop.permute.xlu0 %2001
    %v2004 = vsel %vm784, %v1704, 0
    %v2007 = vsel %vm844, %v2002, 0
    %2009 = vmatprep.subr.bf16.mxu0 0
    %2010 = vmatpush1.bf16.msra.mxu0 %v2007
    %2011 = vmatprep.subr.bf16.mxu0 0
    %2012 = vmatpush1.bf16.msra.mxu0 0
    %2013 = vmatprep.subr.bf16.mxu0 0
    %2014 = vmatpush1.bf16.msra.mxu0 0
    %2015 = vmatprep.subr.bf16.mxu0 0
    %2016 = vmatpush1.bf16.msra.mxu0 0
    %2017 = vmatprep.subr.bf16.mxu0 0
    %2018 = vmatpush1.bf16.msra.mxu0 0
    %2019 = vmatprep.subr.bf16.mxu0 0
    %2020 = vmatpush1.bf16.msra.mxu0 0
    %2021 = vmatprep.subr.bf16.mxu0 0
    %2022 = vmatpush1.bf16.msra.mxu0 0
    %2023 = vmatprep.subr.bf16.mxu0 0
    %2024 = vmatpush1.bf16.msra.mxu0 0
    %2025 = vmatprep.subr.bf16.mxu0 0
    %2026 = vmatpush1.bf16.msra.mxu0 0
    %2027 = vmatprep.subr.bf16.mxu0 0
    %2028 = vmatpush1.bf16.msra.mxu0 0
    %2029 = vmatprep.subr.bf16.mxu0 0
    %2030 = vmatpush1.bf16.msra.mxu0 0
    %2031 = vmatprep.subr.bf16.mxu0 0
    %2032 = vmatpush1.bf16.msra.mxu0 0
    %2033 = vmatprep.subr.bf16.mxu0 0
    %2034 = vmatpush1.bf16.msra.mxu0 0
    %2035 = vmatprep.subr.bf16.mxu0 0
    %2036 = vmatpush1.bf16.msra.mxu0 0
    %2037 = vmatprep.subr.bf16.mxu0 0
    %2038 = vmatpush1.bf16.msra.mxu0 0
    %2039 = vmatprep.subr.bf16.mxu0 0
    %2040 = vmatpush1.bf16.msra.mxu0 0
    %2041 = vmatprep.mubr.bf16.mxu0 0
    %2042 = vmatmul.mubr.bf16.gmra.mrb[0].mxu0 %v2004
    %v2043 = vpop.f32.mrb[0].mxu0
    %v2044 = vadd.f32 0.0, %v2043
    %v2045 = vpop.f32.mrb[0].mxu0
    %v2046 = vpop.f32.mrb[0].mxu0
    %v2047 = vpop.f32.mrb[0].mxu0
    %2048 = vdwg.mxu0
    %2050 = vrot.lane.b32.xlu0 %v319, 96
    %v2051 = vpop.permute.xlu0 %2050
    %v2053 = vsel %vm784, %v1705, 0
    %v2056 = vsel %vm844, %v2051, 0
    %2058 = vmatprep.subr.bf16.mxu0 0
    %2059 = vmatpush1.bf16.msra.mxu0 %v2056
    %2060 = vmatprep.subr.bf16.mxu0 0
    %2061 = vmatpush1.bf16.msra.mxu0 0
    %2062 = vmatprep.subr.bf16.mxu0 0
    %2063 = vmatpush1.bf16.msra.mxu0 0
    %2064 = vmatprep.subr.bf16.mxu0 0
    %2065 = vmatpush1.bf16.msra.mxu0 0
    %2066 = vmatprep.subr.bf16.mxu0 0
    %2067 = vmatpush1.bf16.msra.mxu0 0
    %2068 = vmatprep.subr.bf16.mxu0 0
    %2069 = vmatpush1.bf16.msra.mxu0 0
    %2070 = vmatprep.subr.bf16.mxu0 0
    %2071 = vmatpush1.bf16.msra.mxu0 0
    %2072 = vmatprep.subr.bf16.mxu0 0
    %2073 = vmatpush1.bf16.msra.mxu0 0
    %2074 = vmatprep.subr.bf16.mxu0 0
    %2075 = vmatpush1.bf16.msra.mxu0 0
    %2076 = vmatprep.subr.bf16.mxu0 0
    %2077 = vmatpush1.bf16.msra.mxu0 0
    %2078 = vmatprep.subr.bf16.mxu0 0
    %2079 = vmatpush1.bf16.msra.mxu0 0
    %2080 = vmatprep.subr.bf16.mxu0 0
    %2081 = vmatpush1.bf16.msra.mxu0 0
    %2082 = vmatprep.subr.bf16.mxu0 0
    %2083 = vmatpush1.bf16.msra.mxu0 0
    %2084 = vmatprep.subr.bf16.mxu0 0
    %2085 = vmatpush1.bf16.msra.mxu0 0
    %2086 = vmatprep.subr.bf16.mxu0 0
    %2087 = vmatpush1.bf16.msra.mxu0 0
    %2088 = vmatprep.subr.bf16.mxu0 0
    %2089 = vmatpush1.bf16.msra.mxu0 0
    %2090 = vmatprep.mubr.bf16.mxu0 0
    %2091 = vmatmul.mubr.bf16.gmra.mrb[0].mxu0 %v2053
    %v2092 = vpop.f32.mrb[0].mxu0
    %v2093 = vadd.f32 0.0, %v2092
    %v2094 = vpop.f32.mrb[0].mxu0
    %v2095 = vpop.f32.mrb[0].mxu0
    %v2096 = vpop.f32.mrb[0].mxu0
    %2097 = vdwg.mxu0
    %v2098 = vpack.c.bf16 %v1799, %v1750
    %v2099 = vpack.c.bf16 %v1897, %v1848
    %v2100 = vpack.c.bf16 %v1995, %v1946
    %v2101 = vpack.c.bf16 %v2093, %v2044
    %v2102 = vld [vmem:[%s4 + $0x10] sm:$0xf]
    %v2103 = vld [vmem:[%s4 + $0x14] sm:$0xf]
    %v2104 = vld [vmem:[%s4 + $0x18] sm:$0xf]
    %v2105 = vld [vmem:[%s4 + $0x1c] sm:$0xf]
    %v2110 = vunpack.c.l.b16 %v2102
    %v2111 = vunpack.c.l.b16 %v2103
    %v2112 = vunpack.c.l.b16 %v2104
    %v2113 = vunpack.c.l.b16 %v2105
    %v2114 = vpack.c.b16 %v2111, %v2110
    %v2115 = vpack.c.b16 %v2113, %v2112
    %v2119 = vsel %vm218, %v2098, 0
    %v2122 = vsel %vm218, %v2099, 0
    %v2125 = vsel %vm218, %v2100, 0
    %v2128 = vsel %vm218, %v2101, 0
    %2130 = vmatprep.subr.bf16.mxu0 0
    %2131 = vmatpush1.bf16.msra.mxu0 %v2114
    %2132 = vmatprep.subr.bf16.mxu0 0
    %2133 = vmatpush1.bf16.msra.mxu0 %v2115
    %2134 = vmatprep.subr.bf16.mxu0 0
    %2135 = vmatpush1.bf16.msra.mxu0 0
    %2136 = vmatprep.subr.bf16.mxu0 0
    %2137 = vmatpush1.bf16.msra.mxu0 0
    %2138 = vmatprep.subr.bf16.mxu0 0
    %2139 = vmatpush1.bf16.msra.mxu0 0
    %2140 = vmatprep.subr.bf16.mxu0 0
    %2141 = vmatpush1.bf16.msra.mxu0 0
    %2142 = vmatprep.subr.bf16.mxu0 0
    %2143 = vmatpush1.bf16.msra.mxu0 0
    %2144 = vmatprep.subr.bf16.mxu0 0
    %2145 = vmatpush1.bf16.msra.mxu0 0
    %2146 = vmatprep.subr.bf16.mxu0 0
    %2147 = vmatpush1.bf16.msra.mxu0 0
    %2148 = vmatprep.subr.bf16.mxu0 0
    %2149 = vmatpush1.bf16.msra.mxu0 0
    %2150 = vmatprep.subr.bf16.mxu0 0
    %2151 = vmatpush1.bf16.msra.mxu0 0
    %2152 = vmatprep.subr.bf16.mxu0 0
    %2153 = vmatpush1.bf16.msra.mxu0 0
    %2154 = vmatprep.subr.bf16.mxu0 0
    %2155 = vmatpush1.bf16.msra.mxu0 0
    %2156 = vmatprep.subr.bf16.mxu0 0
    %2157 = vmatpush1.bf16.msra.mxu0 0
    %2158 = vmatprep.subr.bf16.mxu0 0
    %2159 = vmatpush1.bf16.msra.mxu0 0
    %2160 = vmatprep.subr.bf16.mxu0 0
    %2161 = vmatpush1.bf16.msra.mxu0 0
    %2162 = vmatprep.mubr.bf16.mxu0 0
    %2163 = vmatmul.mubr.bf16.gmra.mrb[0].mxu0 %v2119
    %v2164 = vpop.f32.mrb[0].mxu0
    %v2165 = vadd.f32 0.0, %v2164
    %v2166 = vpop.f32.mrb[0].mxu0
    %v2167 = vpop.f32.mrb[0].mxu0
    %v2168 = vadd.f32 0.0, %v2167
    %v2169 = vpop.f32.mrb[0].mxu0
    %2170 = vmatprep.mubr.bf16.mxu0 0
    %2171 = vmatmul.mubr.bf16.gmra.mrb[0].mxu0 %v2122
    %v2172 = vpop.f32.mrb[0].mxu0
    %v2173 = vadd.f32 0.0, %v2172
    %v2174 = vpop.f32.mrb[0].mxu0
    %v2175 = vpop.f32.mrb[0].mxu0
    %v2176 = vadd.f32 0.0, %v2175
    %v2177 = vpop.f32.mrb[0].mxu0
    %2178 = vmatprep.mubr.bf16.mxu0 0
    %2179 = vmatmul.mubr.bf16.gmra.mrb[0].mxu0 %v2125
    %v2180 = vpop.f32.mrb[0].mxu0
    %v2181 = vadd.f32 0.0, %v2180
    %v2182 = vpop.f32.mrb[0].mxu0
    %v2183 = vpop.f32.mrb[0].mxu0
    %v2184 = vadd.f32 0.0, %v2183
    %v2185 = vpop.f32.mrb[0].mxu0
    %2186 = vmatprep.mubr.bf16.mxu0 0
    %2187 = vmatmul.mubr.bf16.gmra.mrb[0].mxu0 %v2128
    %v2188 = vpop.f32.mrb[0].mxu0
    %v2189 = vadd.f32 0.0, %v2188
    %v2190 = vpop.f32.mrb[0].mxu0
    %v2191 = vpop.f32.mrb[0].mxu0
    %v2192 = vadd.f32 0.0, %v2191
    %v2193 = vpop.f32.mrb[0].mxu0
    %2194 = vdwg.mxu0
    %v2199 = vunpack.c.l.b16 %v1214
    %v2200 = vunpack.c.l.b16 %v1215
    %v2201 = vunpack.c.l.b16 %v1216
    %v2202 = vunpack.c.l.b16 %v1217
    %v2203 = vpack.c.b16 %v2200, %v2199
    %v2204 = vpack.c.b16 %v2202, %v2201
    %v2208 = vsel %vm218, %v1210, 0
    %v2211 = vsel %vm218, %v1211, 0
    %v2214 = vsel %vm218, %v1212, 0
    %v2217 = vsel %vm218, %v1213, 0
    %2219 = vmatprep.subr.bf16.mxu0 0
    %2220 = vmatpush1.bf16.msra.mxu0 %v2203
    %2221 = vmatprep.subr.bf16.mxu0 0
    %2222 = vmatpush1.bf16.msra.mxu0 %v2204
    %2223 = vmatprep.subr.bf16.mxu0 0
    %2224 = vmatpush1.bf16.msra.mxu0 0
    %2225 = vmatprep.subr.bf16.mxu0 0
    %2226 = vmatpush1.bf16.msra.mxu0 0
    %2227 = vmatprep.subr.bf16.mxu0 0
    %2228 = vmatpush1.bf16.msra.mxu0 0
    %2229 = vmatprep.subr.bf16.mxu0 0
    %2230 = vmatpush1.bf16.msra.mxu0 0
    %2231 = vmatprep.subr.bf16.mxu0 0
    %2232 = vmatpush1.bf16.msra.mxu0 0
    %2233 = vmatprep.subr.bf16.mxu0 0
    %2234 = vmatpush1.bf16.msra.mxu0 0
    %2235 = vmatprep.subr.bf16.mxu0 0
    %2236 = vmatpush1.bf16.msra.mxu0 0
    %2237 = vmatprep.subr.bf16.mxu0 0
    %2238 = vmatpush1.bf16.msra.mxu0 0
    %2239 = vmatprep.subr.bf16.mxu0 0
    %2240 = vmatpush1.bf16.msra.mxu0 0
    %2241 = vmatprep.subr.bf16.mxu0 0
    %2242 = vmatpush1.bf16.msra.mxu0 0
    %2243 = vmatprep.subr.bf16.mxu0 0
    %2244 = vmatpush1.bf16.msra.mxu0 0
    %2245 = vmatprep.subr.bf16.mxu0 0
    %2246 = vmatpush1.bf16.msra.mxu0 0
    %2247 = vmatprep.subr.bf16.mxu0 0
    %2248 = vmatpush1.bf16.msra.mxu0 0
    %2249 = vmatprep.subr.bf16.mxu0 0
    %2250 = vmatpush1.bf16.msra.mxu0 0
    %2251 = vmatprep.mubr.bf16.mxu0 0
    %2252 = vmatmul.mubr.bf16.gmra.mrb[0].mxu0 %v2208
    %v2253 = vpop.f32.mrb[0].mxu0
    %v2254 = vadd.f32 %v2165, %v2253
    %v2255 = vpop.f32.mrb[0].mxu0
    %v2256 = vpop.f32.mrb[0].mxu0
    %v2257 = vadd.f32 %v2168, %v2256
    %v2258 = vpop.f32.mrb[0].mxu0
    %2259 = vmatprep.mubr.bf16.mxu0 0
    %2260 = vmatmul.mubr.bf16.gmra.mrb[0].mxu0 %v2211
    %v2261 = vpop.f32.mrb[0].mxu0
    %v2262 = vadd.f32 %v2173, %v2261
    %v2263 = vpop.f32.mrb[0].mxu0
    %v2264 = vpop.f32.mrb[0].mxu0
    %v2265 = vadd.f32 %v2176, %v2264
    %v2266 = vpop.f32.mrb[0].mxu0
    %2267 = vmatprep.mubr.bf16.mxu0 0
    %2268 = vmatmul.mubr.bf16.gmra.mrb[0].mxu0 %v2214
    %v2269 = vpop.f32.mrb[0].mxu0
    %v2270 = vadd.f32 %v2181, %v2269
    %v2271 = vpop.f32.mrb[0].mxu0
    %v2272 = vpop.f32.mrb[0].mxu0
    %v2273 = vadd.f32 %v2184, %v2272
    %v2274 = vpop.f32.mrb[0].mxu0
    %2275 = vmatprep.mubr.bf16.mxu0 0
    %2276 = vmatmul.mubr.bf16.gmra.mrb[0].mxu0 %v2217
    %v2277 = vpop.f32.mrb[0].mxu0
    %v2278 = vadd.f32 %v2189, %v2277
    %v2279 = vpop.f32.mrb[0].mxu0
    %v2280 = vpop.f32.mrb[0].mxu0
    %v2281 = vadd.f32 %v2192, %v2280
    %v2282 = vpop.f32.mrb[0].mxu0
    %2283 = vdwg.mxu0
    %v2284 = vld [vmem:[%s5] sm:$0x1]
    %v2286 = vlaneseq
    %v2287 = vshrl.u32 %v2286, 7
    %v2288 = vsub.s32 0, %v2287
    %v2289 = vrot.slane %v2284, %v2288
    %v2291 = vadd.f32 %v2254, %v2289
    %v2292 = vadd.f32 %v2257, %v2289
    %v2293 = vadd.f32 %v2262, %v2289
    %v2294 = vadd.f32 %v2265, %v2289
    %v2295 = vadd.f32 %v2270, %v2289
    %v2296 = vadd.f32 %v2273, %v2289
    %v2297 = vadd.f32 %v2278, %v2289
    %v2298 = vadd.f32 %v2281, %v2289
    %v2299 = vtanh.pop %v2291
    %v2300 = vtanh.pop %v2292
    %v2301 = vtanh.pop %v2293
    %v2302 = vtanh.pop %v2294
    %v2303 = vtanh.pop %v2295
    %v2304 = vtanh.pop %v2296
    %v2305 = vtanh.pop %v2297
    %v2306 = vtanh.pop %v2298
    %v2307 = vld [vmem:[%s6] sm:$0x1]
    %v2309 = vlaneseq
    %v2310 = vshrl.u32 %v2309, 7
    %v2311 = vsub.s32 0, %v2310
    %v2312 = vrot.slane %v2307, %v2311
    %v2314 = vmul.f32 %v2299, %v2312
    %v2315 = vmul.f32 %v2300, %v2312
    %v2316 = vmul.f32 %v2301, %v2312
    %v2317 = vmul.f32 %v2302, %v2312
    %v2318 = vmul.f32 %v2303, %v2312
    %v2319 = vmul.f32 %v2304, %v2312
    %v2320 = vmul.f32 %v2305, %v2312
    %v2321 = vmul.f32 %v2306, %v2312
    %v2322 = vsel %vm218, %v2314, 0.0
    %2323 = vadd.xlane.f32.xlu0 %v2322
    %v2324 = vpop.xlane.xlu0 %2323
    %v2325 = vsel %vm218, %v2315, 0.0
    %2326 = vadd.xlane.f32.xlu0 %v2325
    %v2327 = vpop.xlane.xlu0 %2326
    %v2328 = vsel %vm218, %v2316, 0.0
    %2329 = vadd.xlane.f32.xlu0 %v2328
    %v2330 = vpop.xlane.xlu0 %2329
    %v2331 = vsel %vm218, %v2317, 0.0
    %2332 = vadd.xlane.f32.xlu0 %v2331
    %v2333 = vpop.xlane.xlu0 %2332
    %v2334 = vsel %vm218, %v2318, 0.0
    %2335 = vadd.xlane.f32.xlu0 %v2334
    %v2336 = vpop.xlane.xlu0 %2335
    %v2337 = vsel %vm218, %v2319, 0.0
    %2338 = vadd.xlane.f32.xlu0 %v2337
    %v2339 = vpop.xlane.xlu0 %2338
    %v2340 = vsel %vm218, %v2320, 0.0
    %2341 = vadd.xlane.f32.xlu0 %v2340
    %v2342 = vpop.xlane.xlu0 %2341
    %v2343 = vsel %vm218, %v2321, 0.0
    %2344 = vadd.xlane.f32.xlu0 %v2343
    %v2345 = vpop.xlane.xlu0 %2344
    %v2346 = vld [vmem:[#allocation2] sm:$0x1]
    %v2348 = vlaneseq
    %v2349 = vshrl.u32 %v2348, 7
    %v2350 = vsub.s32 0, %v2349
    %v2351 = vrot.slane %v2346, %v2350
    %v2353 = vadd.f32 %v2324, %v2351
    %v2354 = vadd.f32 %v2327, %v2351
    %v2355 = vadd.f32 %v2330, %v2351
    %v2356 = vadd.f32 %v2333, %v2351
    %v2357 = vadd.f32 %v2336, %v2351
    %v2358 = vadd.f32 %v2339, %v2351
    %v2359 = vadd.f32 %v2342, %v2351
    %v2360 = vadd.f32 %v2345, %v2351
    %v2361 = vmul.f32 %v2353, 1.442695
    %v2362 = vpow.pop %v2361
    %v2363 = vmul.f32 %v2354, 1.442695
    %v2364 = vpow.pop %v2363
    %v2365 = vmul.f32 %v2355, 1.442695
    %v2366 = vpow.pop %v2365
    %v2367 = vmul.f32 %v2356, 1.442695
    %v2368 = vpow.pop %v2367
    %v2369 = vmul.f32 %v2357, 1.442695
    %v2370 = vpow.pop %v2369
    %v2371 = vmul.f32 %v2358, 1.442695
    %v2372 = vpow.pop %v2371
    %v2373 = vmul.f32 %v2359, 1.442695
    %v2374 = vpow.pop %v2373
    %v2375 = vmul.f32 %v2360, 1.442695
    %v2376 = vpow.pop %v2375
    %v2377 = vmul.f32 %v2362, %v104
    %v2378 = vmul.f32 %v2364, %v111
    %v2379 = vmul.f32 %v2366, %v118
    %v2380 = vmul.f32 %v2368, %v125
    %v2381 = vmul.f32 %v2370, %v132
    %v2382 = vmul.f32 %v2372, %v139
    %v2383 = vmul.f32 %v2374, %v146
    %v2384 = vmul.f32 %v2376, %v153
    %vm2385 = vcmask 7168
    %v2386 = vsel %vm2385, %v2377, 0.0
    %v2387 = vrot.slane %v2386, 4
    %v2388 = vadd.f32 %v2386, %v2387
    %v2389 = vrot.slane %v2388, 2
    %v2390 = vadd.f32 %v2388, %v2389
    %v2391 = vrot.slane %v2390, 1
    %v2392 = vadd.f32 %v2390, %v2391
    %v2393 = vsel %vm2385, %v2378, 0.0
    %v2394 = vrot.slane %v2393, 4
    %v2395 = vadd.f32 %v2393, %v2394
    %v2396 = vrot.slane %v2395, 2
    %v2397 = vadd.f32 %v2395, %v2396
    %v2398 = vrot.slane %v2397, 1
    %v2399 = vadd.f32 %v2397, %v2398
    %v2400 = vsel %vm2385, %v2379, 0.0
    %v2401 = vrot.slane %v2400, 4
    %v2402 = vadd.f32 %v2400, %v2401
    %v2403 = vrot.slane %v2402, 2
    %v2404 = vadd.f32 %v2402, %v2403
    %v2405 = vrot.slane %v2404, 1
    %v2406 = vadd.f32 %v2404, %v2405
    %v2407 = vsel %vm2385, %v2380, 0.0
    %v2408 = vrot.slane %v2407, 4
    %v2409 = vadd.f32 %v2407, %v2408
    %v2410 = vrot.slane %v2409, 2
    %v2411 = vadd.f32 %v2409, %v2410
    %v2412 = vrot.slane %v2411, 1
    %v2413 = vadd.f32 %v2411, %v2412
    %v2414 = vsel %vm2385, %v2381, 0.0
    %v2415 = vrot.slane %v2414, 4
    %v2416 = vadd.f32 %v2414, %v2415
    %v2417 = vrot.slane %v2416, 2
    %v2418 = vadd.f32 %v2416, %v2417
    %v2419 = vrot.slane %v2418, 1
    %v2420 = vadd.f32 %v2418, %v2419
    %v2421 = vsel %vm2385, %v2382, 0.0
    %v2422 = vrot.slane %v2421, 4
    %v2423 = vadd.f32 %v2421, %v2422
    %v2424 = vrot.slane %v2423, 2
    %v2425 = vadd.f32 %v2423, %v2424
    %v2426 = vrot.slane %v2425, 1
    %v2427 = vadd.f32 %v2425, %v2426
    %v2428 = vsel %vm2385, %v2383, 0.0
    %v2429 = vrot.slane %v2428, 4
    %v2430 = vadd.f32 %v2428, %v2429
    %v2431 = vrot.slane %v2430, 2
    %v2432 = vadd.f32 %v2430, %v2431
    %v2433 = vrot.slane %v2432, 1
    %v2434 = vadd.f32 %v2432, %v2433
    %v2435 = vsel %vm2385, %v2384, 0.0
    %v2436 = vrot.slane %v2435, 4
    %v2437 = vadd.f32 %v2435, %v2436
    %v2438 = vrot.slane %v2437, 2
    %v2439 = vadd.f32 %v2437, %v2438
    %v2440 = vrot.slane %v2439, 1
    %v2441 = vadd.f32 %v2439, %v2440
    %v2442 = vadd.f32 %v2392, 1e-08
    %v2443 = vadd.f32 %v2399, 1e-08
    %v2444 = vadd.f32 %v2406, 1e-08
    %v2445 = vadd.f32 %v2413, 1e-08
    %v2446 = vadd.f32 %v2420, 1e-08
    %v2447 = vadd.f32 %v2427, 1e-08
    %v2448 = vadd.f32 %v2434, 1e-08
    %v2449 = vadd.f32 %v2441, 1e-08
    %v2450 = vrcp.pop %v2442
    %v2451 = vrcp.pop %v2443
    %v2452 = vrcp.pop %v2444
    %v2453 = vrcp.pop %v2445
    %v2454 = vrcp.pop %v2446
    %v2455 = vrcp.pop %v2447
    %v2456 = vrcp.pop %v2448
    %v2457 = vrcp.pop %v2449
    %v2458 = vmul.f32 %v2377, %v2450
    %v2459 = vmul.f32 %v2378, %v2451
    %v2460 = vmul.f32 %v2379, %v2452
    %v2461 = vmul.f32 %v2380, %v2453
    %v2462 = vmul.f32 %v2381, %v2454
    %v2463 = vmul.f32 %v2382, %v2455
    %v2464 = vmul.f32 %v2383, %v2456
    %v2465 = vmul.f32 %v2384, %v2457
    %2467 = vset.pattern.permute.xlu0 0
    %2468 = vperm.xlu0 %2467, %v2458
    %v2469 = vpop.permute.xlu0 %2468
    %2472 = vset.pattern.permute.xlu0 0
    %2473 = vperm.xlu0 %2472, %v2459
    %v2474 = vpop.permute.xlu0 %2473
    %2477 = vset.pattern.permute.xlu0 0
    %2478 = vperm.xlu0 %2477, %v2460
    %v2479 = vpop.permute.xlu0 %2478
    %2482 = vset.pattern.permute.xlu0 0
    %2483 = vperm.xlu0 %2482, %v2461
    %v2484 = vpop.permute.xlu0 %2483
    %2487 = vset.pattern.permute.xlu0 0
    %2488 = vperm.xlu0 %2487, %v2462
    %v2489 = vpop.permute.xlu0 %2488
    %2492 = vset.pattern.permute.xlu0 0
    %2493 = vperm.xlu0 %2492, %v2463
    %v2494 = vpop.permute.xlu0 %2493
    %2497 = vset.pattern.permute.xlu0 0
    %2498 = vperm.xlu0 %2497, %v2464
    %v2499 = vpop.permute.xlu0 %2498
    %2502 = vset.pattern.permute.xlu0 0
    %2503 = vperm.xlu0 %2502, %v2465
    %v2504 = vpop.permute.xlu0 %2503
    %v2506 = vmul.f32 %v883, %v2469
    %v2507 = vmul.f32 %v929, %v2474
    %v2508 = vmul.f32 %v975, %v2479
    %v2509 = vmul.f32 %v1021, %v2484
    %v2510 = vmul.f32 %v1067, %v2489
    %v2511 = vmul.f32 %v1113, %v2494
    %v2512 = vmul.f32 %v1159, %v2499
    %v2513 = vmul.f32 %v1205, %v2504
    %v2514 = vsel %vm218, %v2506, 0.0
    %v2515 = vrot.slane %v2514, 4
    %v2516 = vadd.f32 %v2514, %v2515
    %v2517 = vrot.slane %v2516, 2
    %v2518 = vadd.f32 %v2516, %v2517
    %v2519 = vrot.slane %v2518, 1
    %v2520 = vadd.f32 %v2518, %v2519
    %v2521 = vsel %vm218, %v2507, 0.0
    %v2522 = vrot.slane %v2521, 4
    %v2523 = vadd.f32 %v2521, %v2522
    %v2524 = vrot.slane %v2523, 2
    %v2525 = vadd.f32 %v2523, %v2524
    %v2526 = vrot.slane %v2525, 1
    %v2527 = vadd.f32 %v2525, %v2526
    %v2528 = vsel %vm218, %v2508, 0.0
    %v2529 = vrot.slane %v2528, 4
    %v2530 = vadd.f32 %v2528, %v2529
    %v2531 = vrot.slane %v2530, 2
    %v2532 = vadd.f32 %v2530, %v2531
    %v2533 = vrot.slane %v2532, 1
    %v2534 = vadd.f32 %v2532, %v2533
    %v2535 = vsel %vm218, %v2509, 0.0
    %v2536 = vrot.slane %v2535, 4
    %v2537 = vadd.f32 %v2535, %v2536
    %v2538 = vrot.slane %v2537, 2
    %v2539 = vadd.f32 %v2537, %v2538
    %v2540 = vrot.slane %v2539, 1
    %v2541 = vadd.f32 %v2539, %v2540
    %v2542 = vsel %vm218, %v2510, 0.0
    %v2543 = vrot.slane %v2542, 4
    %v2544 = vadd.f32 %v2542, %v2543
    %v2545 = vrot.slane %v2544, 2
    %v2546 = vadd.f32 %v2544, %v2545
    %v2547 = vrot.slane %v2546, 1
    %v2548 = vadd.f32 %v2546, %v2547
    %v2549 = vsel %vm218, %v2511, 0.0
    %v2550 = vrot.slane %v2549, 4
    %v2551 = vadd.f32 %v2549, %v2550
    %v2552 = vrot.slane %v2551, 2
    %v2553 = vadd.f32 %v2551, %v2552
    %v2554 = vrot.slane %v2553, 1
    %v2555 = vadd.f32 %v2553, %v2554
    %v2556 = vsel %vm218, %v2512, 0.0
    %v2557 = vrot.slane %v2556, 4
    %v2558 = vadd.f32 %v2556, %v2557
    %v2559 = vrot.slane %v2558, 2
    %v2560 = vadd.f32 %v2558, %v2559
    %v2561 = vrot.slane %v2560, 1
    %v2562 = vadd.f32 %v2560, %v2561
    %v2563 = vsel %vm218, %v2513, 0.0
    %v2564 = vrot.slane %v2563, 4
    %v2565 = vadd.f32 %v2563, %v2564
    %v2566 = vrot.slane %v2565, 2
    %v2567 = vadd.f32 %v2565, %v2566
    %v2568 = vrot.slane %v2567, 1
    %v2569 = vadd.f32 %v2567, %v2568
    %v2570 = vmul.f32 %v1750, %v2469
    %v2571 = vmul.f32 %v1799, %v2474
    %v2572 = vmul.f32 %v1848, %v2479
    %v2573 = vmul.f32 %v1897, %v2484
    %v2574 = vmul.f32 %v1946, %v2489
    %v2575 = vmul.f32 %v1995, %v2494
    %v2576 = vmul.f32 %v2044, %v2499
    %v2577 = vmul.f32 %v2093, %v2504
    %v2578 = vsel %vm218, %v2570, 0.0
    %v2579 = vrot.slane %v2578, 4
    %v2580 = vadd.f32 %v2578, %v2579
    %v2581 = vrot.slane %v2580, 2
    %v2582 = vadd.f32 %v2580, %v2581
    %v2583 = vrot.slane %v2582, 1
    %v2584 = vadd.f32 %v2582, %v2583
    %v2585 = vsel %vm218, %v2571, 0.0
    %v2586 = vrot.slane %v2585, 4
    %v2587 = vadd.f32 %v2585, %v2586
    %v2588 = vrot.slane %v2587, 2
    %v2589 = vadd.f32 %v2587, %v2588
    %v2590 = vrot.slane %v2589, 1
    %v2591 = vadd.f32 %v2589, %v2590
    %v2592 = vsel %vm218, %v2572, 0.0
    %v2593 = vrot.slane %v2592, 4
    %v2594 = vadd.f32 %v2592, %v2593
    %v2595 = vrot.slane %v2594, 2
    %v2596 = vadd.f32 %v2594, %v2595
    %v2597 = vrot.slane %v2596, 1
    %v2598 = vadd.f32 %v2596, %v2597
    %v2599 = vsel %vm218, %v2573, 0.0
    %v2600 = vrot.slane %v2599, 4
    %v2601 = vadd.f32 %v2599, %v2600
    %v2602 = vrot.slane %v2601, 2
    %v2603 = vadd.f32 %v2601, %v2602
    %v2604 = vrot.slane %v2603, 1
    %v2605 = vadd.f32 %v2603, %v2604
    %v2606 = vsel %vm218, %v2574, 0.0
    %v2607 = vrot.slane %v2606, 4
    %v2608 = vadd.f32 %v2606, %v2607
    %v2609 = vrot.slane %v2608, 2
    %v2610 = vadd.f32 %v2608, %v2609
    %v2611 = vrot.slane %v2610, 1
    %v2612 = vadd.f32 %v2610, %v2611
    %v2613 = vsel %vm218, %v2575, 0.0
    %v2614 = vrot.slane %v2613, 4
    %v2615 = vadd.f32 %v2613, %v2614
    %v2616 = vrot.slane %v2615, 2
    %v2617 = vadd.f32 %v2615, %v2616
    %v2618 = vrot.slane %v2617, 1
    %v2619 = vadd.f32 %v2617, %v2618
    %v2620 = vsel %vm218, %v2576, 0.0
    %v2621 = vrot.slane %v2620, 4
    %v2622 = vadd.f32 %v2620, %v2621
    %v2623 = vrot.slane %v2622, 2
    %v2624 = vadd.f32 %v2622, %v2623
    %v2625 = vrot.slane %v2624, 1
    %v2626 = vadd.f32 %v2624, %v2625
    %v2627 = vsel %vm218, %v2577, 0.0
    %v2628 = vrot.slane %v2627, 4
    %v2629 = vadd.f32 %v2627, %v2628
    %v2630 = vrot.slane %v2629, 2
    %v2631 = vadd.f32 %v2629, %v2630
    %v2632 = vrot.slane %v2631, 1
    %v2633 = vadd.f32 %v2631, %v2632
    %vm2642 = vcmask 1041409
    %v2643 = vsel %vm2642, %v2527, %v2520
    %vm2644 = vcmask 1042434
    %v2645 = vsel %vm2644, %v2534, %v2643
    %vm2646 = vcmask 1043459
    %v2647 = vsel %vm2646, %v2541, %v2645
    %vm2648 = vcmask 1044484
    %v2649 = vsel %vm2648, %v2548, %v2647
    %vm2650 = vcmask 1045509
    %v2651 = vsel %vm2650, %v2555, %v2649
    %vm2652 = vcmask 1046534
    %v2653 = vsel %vm2652, %v2562, %v2651
    %vm2654 = vcmask 1047559
    %v2655 = vsel %vm2654, %v2569, %v2653
    %v2665 = vsel %vm2642, %v2591, %v2584
    %v2666 = vsel %vm2644, %v2598, %v2665
    %v2667 = vsel %vm2646, %v2605, %v2666
    %v2668 = vsel %vm2648, %v2612, %v2667
    %v2669 = vsel %vm2650, %v2619, %v2668
    %v2670 = vsel %vm2652, %v2626, %v2669
    %v2671 = vsel %vm2654, %v2633, %v2670
    %2672 = vrot.lane.b32.xlu0 %v2671, 32
    %v2673 = vpop.permute.xlu0 %2672
    %v2675 = vsel %vm218, %v2655, %v2673
    %vm2676 = vcmask 523264
    %v2677 = vsel %vm2676, %v2675, 0.0
    %2678 = vst [vmem:[#allocation6] sm:$0xff] %v2677
    // Predicated region
    $region38: #{tpu_custom_call.1} parent=1 // pred_check
      _
    $region39: #{tpu_custom_call.1} parent=1 // pred_check_branch
      %2680 = sbr.rel (0) target = $region41
    $region40: #{tpu_custom_call.1} parent=1 // pred_region
      %s2682 = ssub.s32 128, 128
      %2683 = vsyncadd [#allocation5], %s2682
      %s2685 = sshll.u32 [#allocation6], 4
      %s2686 = int_to_ptr.vmem [resolvable:$true] %s2685
      %2688 = dma.vmem_to_hbm [thread:$0]  %s2686, 128, %s8, [#allocation5]
    $region41: #{tpu_custom_call.1} parent=1 // pred_fallthru
      _
    // Predicated region
    $region42: #{tpu_custom_call.1} parent=1 // pred_check
      _
    $region43: #{tpu_custom_call.1} parent=1 // pred_check_branch
      %2690 = sbr.rel (0) target = $region45
    $region44: #{tpu_custom_call.1} parent=1 // pred_region
      %2691 = dma.done [#allocation5], 128
    $region45: #{tpu_custom_call.1} parent=1 // pred_fallthru
      _
    %2692 = vsyncpa [#allocation4], 1
    %2693 = vsyncpa [#allocation5], 1

</llo_original>
